<compile_context>
chip_gen: v7x
topology: tpu7x:2x2x1
jax: 0.10.0
libtpu: 0.0.40
codegen_flags: <defaults>
</compile_context>

<pallas_src>
import functools

import numpy as np
import jax
import jax.numpy as jnp
from jax import lax
from jax.experimental import pallas as pl
from jax.experimental.pallas import tpu as pltpu

EPS = 1e-5
LANE = 128          # TPU lane width
IN_W = 128          # board (3*3*3 = 27) padded to one lane-dense slab
OUT_W = 128         # merged output slab: probs cols 0..8, value col VALUE_COL
VALUE_COL = 9
NEG_INF = -1e30     # softmax mask bias for padded policy columns

# Static connectivity of a 3x3 conv (padding=1) on a 3x3 board:
# _CONV_T[pos_in, pos_out, kh, kw] == 1 iff input position pos_in is tapped by
# kernel tap (kh, kw) when producing output position pos_out.
_CONV_T = np.zeros((9, 9, 3, 3), np.float32)
for _ho in range(3):
    for _wo in range(3):
        for _kh in range(3):
            for _kw in range(3):
                _hi, _wi = _ho + _kh - 1, _wo + _kw - 1
                if 0 <= _hi < 3 and 0 <= _wi < 3:
                    _CONV_T[_hi * 3 + _wi, _ho * 3 + _wo, _kh, _kw] = 1.0


# ------------------------------------------------------------------ kernel

def _agent_kernel(x_ref, w0_ref, b0_ref, w1_ref, b1_ref, w2_ref, b2_ref,
                  wvc_ref, bvc_ref, wv1_ref, bv1_ref, wv2_ref, bv2_ref,
                  wpc_ref, bpc_ref, wpl_ref, bpl_ref,
                  out_ref, *, res_layers):
    """Entire Agent forward for one (TB, .) batch block; all tiles stay in VMEM."""

    def mm(x, w, b):
        # bf16 x bf16 -> f32 accumulation on the MXU; bias add in f32 on the VPU
        return jnp.dot(x.astype(jnp.bfloat16), w,
                       preferred_element_type=jnp.float32) + b

    # stem: conv3x3(no bias) + BN + ReLU   (BN scale folded into w0)
    a = jnp.maximum(mm(x_ref[...], w0_ref[...], b0_ref[...]), 0.0)   # (TB, HP)

    # residual tower; skip connection is a vreg add
    if res_layers <= 4:
        # small fixed count -> static unroll
        for i in range(res_layers):
            h = jnp.maximum(mm(a, w1_ref[i], b1_ref[i]), 0.0)
            a = jnp.maximum(mm(h, w2_ref[i], b2_ref[i]) + a, 0.0)
    else:
        # deep tower -> fori_loop keeps vreg live ranges / instruction count flat
        def body(i, acc):
            h = jnp.maximum(mm(acc, w1_ref[i], b1_ref[i]), 0.0)
            return jnp.maximum(mm(h, w2_ref[i], b2_ref[i]) + acc, 0.0)
        a = lax.fori_loop(0, res_layers, body, a)

    # value head: 1x1 conv + BN + ReLU, Linear(9,64)+ReLU, Linear(64,1)+Tanh.
    # The final linear's single output column is pre-placed at VALUE_COL of the
    # 128-wide slab; every other column is exactly 0 (zero weights / bias).
    v = jnp.maximum(mm(a, wvc_ref[...], bvc_ref[...]), 0.0)
    v = jnp.maximum(mm(v, wv1_ref[...], bv1_ref[...]), 0.0)
    value_slab = jnp.tanh(mm(v, wv2_ref[...], bv2_ref[...]))         # (TB, 128)

    # policy head: 1x1 conv + BN + ReLU, Linear(18,9), softmax.  Padded logit
    # columns carry a NEG_INF bias so the 128-lane softmax is exact over the 9
    # real moves and exactly 0 elsewhere (including VALUE_COL).
    p = jnp.maximum(mm(a, wpc_ref[...], bpc_ref[...]), 0.0)
    logits = mm(p, wpl_ref[...], bpl_ref[...])                       # (TB, 128)
    m = jnp.max(logits, axis=-1, keepdims=True)
    e = jnp.exp(logits - m)
    probs_slab = e / jnp.sum(e, axis=-1, keepdims=True)

    # single lane-dense unmasked store: probs in cols 0..8, value in col 9
    out_ref[...] = probs_slab + value_slab


# --------------------------------------------------- parameter preparation

def _fold_bn(gamma, beta, mean, var, conv_bias=None):
    scale = gamma / jnp.sqrt(var + EPS)
    bias = beta - mean * scale
    if conv_bias is not None:
        bias = bias + scale * conv_bias
    return scale, bias


def _conv3x3_to_dense(w, scale, channel_major_rows=False):
    """Conv2d(Cin,Cout,3,padding=1) on a 3x3 board as a (9*Cin, 9*Cout) matrix.

    Rows: (pos_in, ci) [or (ci, pos_in) if channel_major_rows],
    Cols: (pos_out, co).  BN scale is folded into the columns.
    """
    c_out, c_in = w.shape[0], w.shape[1]
    sp = jnp.einsum('pqhw,oihw->piqo', _CONV_T, w) * scale   # (9, Cin, 9, Cout)
    if channel_major_rows:
        sp = jnp.transpose(sp, (1, 0, 2, 3))                 # (Cin, 9, 9, Cout)
    return sp.reshape(9 * c_in, 9 * c_out)


def _pad2d(w, rows, cols):
    out = jnp.zeros((rows, cols), jnp.float32)
    return out.at[:w.shape[0], :w.shape[1]].set(w)


def _pad_bias(b, cols, fill=0.0):
    b = jnp.asarray(b).reshape(-1)
    out = jnp.full((1, cols), fill, jnp.float32)
    return out.at[0, :b.shape[0]].set(b)


def prepare_params(params, channels, res_layers):
    """One-time folding: BN into weights, convs into dense lane-padded bf16
    matrices; softmax mask and output-slab placement baked into head params."""
    C = channels
    H = 9 * C
    HP = max(LANE, ((H + LANE - 1) // LANE) * LANE)   # lane-padded hidden width
    assert res_layers >= 1

    wdt = jnp.bfloat16   # MXU-native weight dtype (v6e/v7x); biases stay f32

    # stem: rows in (c, h, w) order so the NCHW input flattens with a reshape
    s0, b0 = _fold_bn(*params["bn0"])
    w0 = _pad2d(_conv3x3_to_dense(params["conv0_w"], s0, channel_major_rows=True),
                IN_W, HP).astype(wdt)
    b0v = _pad_bias(jnp.tile(b0, 9), HP)

    w1s, b1s, w2s, b2s = [], [], [], []
    for layer in params["res"]:
        s1, bb1 = _fold_bn(*layer["bn1"], conv_bias=layer["b1"])
        w1s.append(_pad2d(_conv3x3_to_dense(layer["w1"], s1), HP, HP).astype(wdt))
        b1s.append(_pad_bias(jnp.tile(bb1, 9), HP))
        s2, bb2 = _fold_bn(*layer["bn2"], conv_bias=layer["b2"])
        w2s.append(_pad2d(_conv3x3_to_dense(layer["w2"], s2), HP, HP).astype(wdt))
        b2s.append(_pad_bias(jnp.tile(bb2, 9), HP))
    # TODO(synk): if C is scaled up so res_layers*2*HP*HP weights approach VMEM,
    # stream w1/w2 per layer via an extra grid axis instead of keeping the
    # stacked tower resident.
    w1_stack, b1_stack = jnp.stack(w1s), jnp.stack(b1s)
    w2_stack, b2_stack = jnp.stack(w2s), jnp.stack(b2s)

    eye9 = jnp.eye(9, dtype=jnp.float32)

    # value head: 1x1 conv (C->1, no bias) + BN(1) as a (HP, 128) matrix
    sv, bv = _fold_bn(*params["vbn"])
    wv = params["vconv_w"].reshape(1, C) * sv[:, None]
    wvc = _pad2d(jnp.einsum('pq,i->piq', eye9, wv[0]).reshape(9 * C, 9),
                 HP, OUT_W).astype(wdt)
    bvc = _pad_bias(jnp.tile(bv, 9), OUT_W)
    wv1 = _pad2d(params["vlin1_w"].T, OUT_W, OUT_W).astype(wdt)       # (9,64) padded
    bv1 = _pad_bias(params["vlin1_b"], OUT_W)
    # final value linear lands directly in column VALUE_COL of the output slab
    wv2 = jnp.zeros((OUT_W, OUT_W), jnp.float32)
    wv2 = wv2.at[:64, VALUE_COL].set(params["vlin2_w"].T[:, 0]).astype(wdt)
    bv2 = jnp.zeros((1, OUT_W), jnp.float32).at[0, VALUE_COL].set(
        params["vlin2_b"][0])

    # policy head: 1x1 conv (C->2, no bias) + BN(2); columns follow PyTorch
    # Flatten order (c_out, h, w).  Pad logit columns get a NEG_INF bias so the
    # in-kernel 128-lane softmax masks them to exactly zero.
    sp_, bp_ = _fold_bn(*params["pbn"])
    wp = params["pconv_w"].reshape(2, C) * sp_[:, None]
    wpc = _pad2d(jnp.einsum('pq,oi->pioq', eye9, wp).reshape(9 * C, 18),
                 HP, OUT_W).astype(wdt)
    bpc = _pad_bias(jnp.repeat(bp_, 9), OUT_W)
    wpl = _pad2d(params["plin_w"].T, OUT_W, OUT_W).astype(wdt)        # (18,9) padded
    bpl = _pad_bias(params["plin_b"], OUT_W, fill=NEG_INF)

    return (w0, b0v, w1_stack, b1_stack, w2_stack, b2_stack,
            wvc, bvc, wv1, bv1, wv2, bv2, wpc, bpc, wpl, bpl)


# --------------------------------------------------------------- forward

def agent_forward(prepped, x_nchw, res_layers, block_b=128):
    B = x_nchw.shape[0]
    # NCHW (B,3,3,3) flattens directly into the (c,h,w) row order the stem
    # matrix expects; pad to a lane-dense (Bp, 128) slab (pad rows/cols hit
    # zero weight rows, so they are numerically inert).
    # TODO(synk): in production deliver the board as int8/bf16 and cast inside
    # the kernel to cut input HBM bytes further.
    x_flat = x_nchw.reshape(B, 27).astype(jnp.float32)
    TB = min(block_b, ((B + 7) // 8) * 8)
    TB = ((TB + 7) // 8) * 8                      # sublane-aligned batch tile
    Bp = ((B + TB - 1) // TB) * TB
    x_pad = jnp.pad(x_flat, ((0, Bp - B), (0, IN_W - 27)))

    def full_spec(arr):
        nd = arr.ndim
        return pl.BlockSpec(arr.shape, lambda i, _nd=nd: (0,) * _nd)

    kernel = functools.partial(_agent_kernel, res_layers=res_layers)
    out = pl.pallas_call(
        kernel,
        out_shape=jax.ShapeDtypeStruct((Bp, OUT_W), jnp.float32),
        grid=(Bp // TB,),
        in_specs=[pl.BlockSpec((TB, IN_W), lambda i: (i, 0))]    # batch-tiled board
                 + [full_spec(p) for p in prepped],              # resident weights
        out_specs=pl.BlockSpec((TB, OUT_W), lambda i: (i, 0)),   # merged slab
        compiler_params=pltpu.CompilerParams(
            dimension_semantics=("parallel",),       # megacore-shard the batch
            vmem_limit_bytes=32 * 1024 * 1024),
    )(x_pad, *prepped)

    probs = out[:B, 0:9]
    value = out[:B, VALUE_COL:VALUE_COL + 1]
    return value, probs


# ------------------------------------------------------- params / reference

def init_params(key, channels, res_layers):
    ks = iter(jax.random.split(key, 64))

    def nrm(shape, s=0.1):
        return s * jax.random.normal(next(ks), shape, jnp.float32)

    def bn(c):
        gamma = 1.0 + 0.1 * jax.random.normal(next(ks), (c,), jnp.float32)
        beta = 0.1 * jax.random.normal(next(ks), (c,), jnp.float32)
        mean = 0.1 * jax.random.normal(next(ks), (c,), jnp.float32)
        var = jax.random.uniform(next(ks), (c,), jnp.float32, minval=0.5, maxval=1.5)
        return gamma, beta, mean, var

    p = {}
    p["conv0_w"] = nrm((channels, 3, 3, 3))
    p["bn0"] = bn(channels)
    p["res"] = []
    for _ in range(res_layers):
        p["res"].append(dict(
            w1=nrm((channels, channels, 3, 3)), b1=nrm((channels,)), bn1=bn(channels),
            w2=nrm((channels, channels, 3, 3)), b2=nrm((channels,)), bn2=bn(channels),
        ))
    p["vconv_w"] = nrm((1, channels, 1, 1))
    p["vbn"] = bn(1)
    p["vlin1_w"] = nrm((64, 9))
    p["vlin1_b"] = nrm((64,))
    p["vlin2_w"] = nrm((1, 64))
    p["vlin2_b"] = nrm((1,))
    p["pconv_w"] = nrm((2, channels, 1, 1))
    p["pbn"] = bn(2)
    p["plin_w"] = nrm((9, 18))
    p["plin_b"] = nrm((9,))
    return p


def _ref_forward(params, x):
    """Pure-JAX f32 reference (conv ops), for correctness checking only."""
    def conv3x3(x, w, b=None):
        y = jax.lax.conv_general_dilated(
            x, w, (1, 1), 'SAME', dimension_numbers=('NCHW', 'OIHW', 'NCHW'))
        if b is not None:
            y = y + b[None, :, None, None]
        return y

    def bn(x, g, be, m, v):
        return ((x - m[None, :, None, None]) / jnp.sqrt(v[None, :, None, None] + EPS)
                * g[None, :, None, None] + be[None, :, None, None])

    a = jax.nn.relu(bn(conv3x3(x, params["conv0_w"]), *params["bn0"]))
    for layer in params["res"]:
        h = jax.nn.relu(bn(conv3x3(a, layer["w1"], layer["b1"]), *layer["bn1"]))
        h = bn(conv3x3(h, layer["w2"], layer["b2"]), *layer["bn2"])
        a = jax.nn.relu(h + a)
    B = x.shape[0]
    v = jnp.einsum('bchw,oc->bohw', a, params["vconv_w"][:, :, 0, 0])
    v = jax.nn.relu(bn(v, *params["vbn"]).reshape(B, 9))
    v = jax.nn.relu(v @ params["vlin1_w"].T + params["vlin1_b"])
    value = jnp.tanh(v @ params["vlin2_w"].T + params["vlin2_b"])
    p = jnp.einsum('bchw,oc->bohw', a, params["pconv_w"][:, :, 0, 0])
    p = jax.nn.relu(bn(p, *params["pbn"]).reshape(B, 18))
    logits = p @ params["plin_w"].T + params["plin_b"]
    return value, jax.nn.softmax(logits, axis=-1)


if __name__ == "__main__":
    # Batch packed to >=128 per perf review (MCTS/self-play leaves batched).
    B, CHANNELS, RES_LAYERS = 256, 8, 2
    x = jax.random.normal(jax.random.PRNGKey(0), (B, 3, 3, 3), jnp.float32)  # NCHW
    params = init_params(jax.random.PRNGKey(42), CHANNELS, RES_LAYERS)

    prepped = prepare_params(params, CHANNELS, RES_LAYERS)   # one-time folding
    fwd = jax.jit(functools.partial(agent_forward, res_layers=RES_LAYERS))

    value, probs = fwd(prepped, x)
    jax.block_until_ready((value, probs))

    # shape / sanity checks
    assert value.shape == (B, 1) and probs.shape == (B, 9)
    assert bool(jnp.all(jnp.isfinite(value))) and bool(jnp.all(jnp.isfinite(probs)))
    assert bool(jnp.allclose(jnp.sum(probs, axis=-1), 1.0, atol=1e-5))

    # numerical check against a pure-JAX f32 reference of the PyTorch module
    # (tolerance widened to bf16-weight level per the perf-review note)
    v_ref, p_ref = _ref_forward(params, x)
    assert bool(jnp.allclose(value, v_ref, atol=3e-2, rtol=3e-2))
    assert bool(jnp.allclose(probs, p_ref, atol=3e-2, rtol=3e-2))

    print("KERNEL_OK")
</pallas_src>

<mosaic_0001>
module attributes {stable_mosaic.version = 11 : i64} {
  func.func @_agent_kernel(%arg0: i32, %arg1: memref<128x128xf32, #tpu.memory_space<vmem>>, %arg2: memref<128x128xbf16, #tpu.memory_space<vmem>>, %arg3: memref<1x128xf32, #tpu.memory_space<vmem>>, %arg4: memref<2x128x128xbf16, #tpu.memory_space<vmem>>, %arg5: memref<2x1x128xf32, #tpu.memory_space<vmem>>, %arg6: memref<2x128x128xbf16, #tpu.memory_space<vmem>>, %arg7: memref<2x1x128xf32, #tpu.memory_space<vmem>>, %arg8: memref<128x128xbf16, #tpu.memory_space<vmem>>, %arg9: memref<1x128xf32, #tpu.memory_space<vmem>>, %arg10: memref<128x128xbf16, #tpu.memory_space<vmem>>, %arg11: memref<1x128xf32, #tpu.memory_space<vmem>>, %arg12: memref<128x128xbf16, #tpu.memory_space<vmem>>, %arg13: memref<1x128xf32, #tpu.memory_space<vmem>>, %arg14: memref<128x128xbf16, #tpu.memory_space<vmem>>, %arg15: memref<1x128xf32, #tpu.memory_space<vmem>>, %arg16: memref<128x128xbf16, #tpu.memory_space<vmem>>, %arg17: memref<1x128xf32, #tpu.memory_space<vmem>>, %arg18: memref<128x128xf32, #tpu.memory_space<vmem>>) attributes {dimension_semantics = [#tpu.dimension_semantics<parallel>], iteration_bounds = array<i64: 2>, scalar_prefetch = 0 : i64, scratch_operands = 0 : i64, tpu.core_type = #tpu.core_type<tc>, window_params = [{transform_indices = @transform_0, window_bounds = array<i64: 128, 128>}, {pipeline_mode = #tpu.pipeline_mode<synchronous>, transform_indices = @transform_1, window_bounds = array<i64: 128, 128>}, {pipeline_mode = #tpu.pipeline_mode<synchronous>, transform_indices = @transform_2, window_bounds = array<i64: 1, 128>}, {pipeline_mode = #tpu.pipeline_mode<synchronous>, transform_indices = @transform_3, window_bounds = array<i64: 2, 128, 128>}, {pipeline_mode = #tpu.pipeline_mode<synchronous>, transform_indices = @transform_4, window_bounds = array<i64: 2, 1, 128>}, {pipeline_mode = #tpu.pipeline_mode<synchronous>, transform_indices = @transform_5, window_bounds = array<i64: 2, 128, 128>}, {pipeline_mode = #tpu.pipeline_mode<synchronous>, transform_indices = @transform_6, window_bounds = array<i64: 2, 1, 128>}, {pipeline_mode = #tpu.pipeline_mode<synchronous>, transform_indices = @transform_7, window_bounds = array<i64: 128, 128>}, {pipeline_mode = #tpu.pipeline_mode<synchronous>, transform_indices = @transform_8, window_bounds = array<i64: 1, 128>}, {pipeline_mode = #tpu.pipeline_mode<synchronous>, transform_indices = @transform_9, window_bounds = array<i64: 128, 128>}, {pipeline_mode = #tpu.pipeline_mode<synchronous>, transform_indices = @transform_10, window_bounds = array<i64: 1, 128>}, {pipeline_mode = #tpu.pipeline_mode<synchronous>, transform_indices = @transform_11, window_bounds = array<i64: 128, 128>}, {pipeline_mode = #tpu.pipeline_mode<synchronous>, transform_indices = @transform_12, window_bounds = array<i64: 1, 128>}, {pipeline_mode = #tpu.pipeline_mode<synchronous>, transform_indices = @transform_13, window_bounds = array<i64: 128, 128>}, {pipeline_mode = #tpu.pipeline_mode<synchronous>, transform_indices = @transform_14, window_bounds = array<i64: 1, 128>}, {pipeline_mode = #tpu.pipeline_mode<synchronous>, transform_indices = @transform_15, window_bounds = array<i64: 128, 128>}, {pipeline_mode = #tpu.pipeline_mode<synchronous>, transform_indices = @transform_16, window_bounds = array<i64: 1, 128>}, {transform_indices = @transform_17, window_bounds = array<i64: 128, 128>}]} {
    %c0 = arith.constant 0 : index
    %c0_0 = arith.constant 0 : index
    %0 = vector.load %arg1[%c0, %c0_0] : memref<128x128xf32, #tpu.memory_space<vmem>>, vector<128x128xf32>
    %c0_1 = arith.constant 0 : index
    %c0_2 = arith.constant 0 : index
    %1 = vector.load %arg2[%c0_1, %c0_2] : memref<128x128xbf16, #tpu.memory_space<vmem>>, vector<128x128xbf16>
    %c0_3 = arith.constant 0 : index
    %c0_4 = arith.constant 0 : index
    %2 = vector.load %arg3[%c0_3, %c0_4] : memref<1x128xf32, #tpu.memory_space<vmem>>, vector<1x128xf32>
    %3 = arith.truncf %0 : vector<128x128xf32> to vector<128x128xbf16>
    %cst = arith.constant dense<0.000000e+00> : vector<128x128xf32>
    %4 = tpu.matmul %3, %1, %cst {dimension_numbers = #tpu.dot_dimension_numbers<[1], [0], [0], [1], [0, 0, 1, 1], [], []>} : vector<128x128xbf16>, vector<128x128xbf16>, vector<128x128xf32> -> vector<128x128xf32>
    %5 = vector.broadcast %2 : vector<1x128xf32> to vector<128x128xf32>
    %6 = arith.addf %4, %5 : vector<128x128xf32>
    %cst_5 = arith.constant 0.000000e+00 : f32
    %7 = vector.broadcast %cst_5 : f32 to vector<128x128xf32>
    %8 = arith.maximumf %6, %7 : vector<128x128xf32>
    %c0_6 = arith.constant 0 : index
    %c0_7 = arith.constant 0 : index
    %c0_8 = arith.constant 0 : index
    %9 = vector.load %arg4[%c0_6, %c0_7, %c0_8] : memref<2x128x128xbf16, #tpu.memory_space<vmem>>, vector<1x128x128xbf16>
    %10 = vector.shape_cast %9 : vector<1x128x128xbf16> to vector<128x128xbf16>
    %c0_9 = arith.constant 0 : index
    %c0_10 = arith.constant 0 : index
    %c0_11 = arith.constant 0 : index
    %11 = vector.load %arg5[%c0_9, %c0_10, %c0_11] : memref<2x1x128xf32, #tpu.memory_space<vmem>>, vector<1x1x128xf32>
    %12 = vector.shape_cast %11 : vector<1x1x128xf32> to vector<1x128xf32>
    %13 = arith.truncf %8 : vector<128x128xf32> to vector<128x128xbf16>
    %cst_12 = arith.constant dense<0.000000e+00> : vector<128x128xf32>
    %14 = tpu.matmul %13, %10, %cst_12 {dimension_numbers = #tpu.dot_dimension_numbers<[1], [0], [0], [1], [0, 0, 1, 1], [], []>} : vector<128x128xbf16>, vector<128x128xbf16>, vector<128x128xf32> -> vector<128x128xf32>
    %15 = vector.broadcast %12 : vector<1x128xf32> to vector<128x128xf32>
    %16 = arith.addf %14, %15 : vector<128x128xf32>
    %cst_13 = arith.constant 0.000000e+00 : f32
    %17 = vector.broadcast %cst_13 : f32 to vector<128x128xf32>
    %18 = arith.maximumf %16, %17 : vector<128x128xf32>
    %c0_14 = arith.constant 0 : index
    %c0_15 = arith.constant 0 : index
    %c0_16 = arith.constant 0 : index
    %19 = vector.load %arg6[%c0_14, %c0_15, %c0_16] : memref<2x128x128xbf16, #tpu.memory_space<vmem>>, vector<1x128x128xbf16>
    %20 = vector.shape_cast %19 : vector<1x128x128xbf16> to vector<128x128xbf16>
    %c0_17 = arith.constant 0 : index
    %c0_18 = arith.constant 0 : index
    %c0_19 = arith.constant 0 : index
    %21 = vector.load %arg7[%c0_17, %c0_18, %c0_19] : memref<2x1x128xf32, #tpu.memory_space<vmem>>, vector<1x1x128xf32>
    %22 = vector.shape_cast %21 : vector<1x1x128xf32> to vector<1x128xf32>
    %23 = arith.truncf %18 : vector<128x128xf32> to vector<128x128xbf16>
    %cst_20 = arith.constant dense<0.000000e+00> : vector<128x128xf32>
    %24 = tpu.matmul %23, %20, %cst_20 {dimension_numbers = #tpu.dot_dimension_numbers<[1], [0], [0], [1], [0, 0, 1, 1], [], []>} : vector<128x128xbf16>, vector<128x128xbf16>, vector<128x128xf32> -> vector<128x128xf32>
    %25 = vector.broadcast %22 : vector<1x128xf32> to vector<128x128xf32>
    %26 = arith.addf %24, %25 : vector<128x128xf32>
    %27 = arith.addf %26, %8 : vector<128x128xf32>
    %cst_21 = arith.constant 0.000000e+00 : f32
    %28 = vector.broadcast %cst_21 : f32 to vector<128x128xf32>
    %29 = arith.maximumf %27, %28 : vector<128x128xf32>
    %c1 = arith.constant 1 : index
    %c0_22 = arith.constant 0 : index
    %c0_23 = arith.constant 0 : index
    %30 = vector.load %arg4[%c1, %c0_22, %c0_23] : memref<2x128x128xbf16, #tpu.memory_space<vmem>>, vector<1x128x128xbf16>
    %31 = vector.shape_cast %30 : vector<1x128x128xbf16> to vector<128x128xbf16>
    %c1_24 = arith.constant 1 : index
    %c0_25 = arith.constant 0 : index
    %c0_26 = arith.constant 0 : index
    %32 = vector.load %arg5[%c1_24, %c0_25, %c0_26] : memref<2x1x128xf32, #tpu.memory_space<vmem>>, vector<1x1x128xf32>
    %33 = vector.shape_cast %32 : vector<1x1x128xf32> to vector<1x128xf32>
    %34 = arith.truncf %29 : vector<128x128xf32> to vector<128x128xbf16>
    %cst_27 = arith.constant dense<0.000000e+00> : vector<128x128xf32>
    %35 = tpu.matmul %34, %31, %cst_27 {dimension_numbers = #tpu.dot_dimension_numbers<[1], [0], [0], [1], [0, 0, 1, 1], [], []>} : vector<128x128xbf16>, vector<128x128xbf16>, vector<128x128xf32> -> vector<128x128xf32>
    %36 = vector.broadcast %33 : vector<1x128xf32> to vector<128x128xf32>
    %37 = arith.addf %35, %36 : vector<128x128xf32>
    %cst_28 = arith.constant 0.000000e+00 : f32
    %38 = vector.broadcast %cst_28 : f32 to vector<128x128xf32>
    %39 = arith.maximumf %37, %38 : vector<128x128xf32>
    %c1_29 = arith.constant 1 : index
    %c0_30 = arith.constant 0 : index
    %c0_31 = arith.constant 0 : index
    %40 = vector.load %arg6[%c1_29, %c0_30, %c0_31] : memref<2x128x128xbf16, #tpu.memory_space<vmem>>, vector<1x128x128xbf16>
    %41 = vector.shape_cast %40 : vector<1x128x128xbf16> to vector<128x128xbf16>
    %c1_32 = arith.constant 1 : index
    %c0_33 = arith.constant 0 : index
    %c0_34 = arith.constant 0 : index
    %42 = vector.load %arg7[%c1_32, %c0_33, %c0_34] : memref<2x1x128xf32, #tpu.memory_space<vmem>>, vector<1x1x128xf32>
    %43 = vector.shape_cast %42 : vector<1x1x128xf32> to vector<1x128xf32>
    %44 = arith.truncf %39 : vector<128x128xf32> to vector<128x128xbf16>
    %cst_35 = arith.constant dense<0.000000e+00> : vector<128x128xf32>
    %45 = tpu.matmul %44, %41, %cst_35 {dimension_numbers = #tpu.dot_dimension_numbers<[1], [0], [0], [1], [0, 0, 1, 1], [], []>} : vector<128x128xbf16>, vector<128x128xbf16>, vector<128x128xf32> -> vector<128x128xf32>
    %46 = vector.broadcast %43 : vector<1x128xf32> to vector<128x128xf32>
    %47 = arith.addf %45, %46 : vector<128x128xf32>
    %48 = arith.addf %47, %29 : vector<128x128xf32>
    %cst_36 = arith.constant 0.000000e+00 : f32
    %49 = vector.broadcast %cst_36 : f32 to vector<128x128xf32>
    %50 = arith.maximumf %48, %49 : vector<128x128xf32>
    %c0_37 = arith.constant 0 : index
    %c0_38 = arith.constant 0 : index
    %51 = vector.load %arg8[%c0_37, %c0_38] : memref<128x128xbf16, #tpu.memory_space<vmem>>, vector<128x128xbf16>
    %c0_39 = arith.constant 0 : index
    %c0_40 = arith.constant 0 : index
    %52 = vector.load %arg9[%c0_39, %c0_40] : memref<1x128xf32, #tpu.memory_space<vmem>>, vector<1x128xf32>
    %53 = arith.truncf %50 : vector<128x128xf32> to vector<128x128xbf16>
    %cst_41 = arith.constant dense<0.000000e+00> : vector<128x128xf32>
    %54 = tpu.matmul %53, %51, %cst_41 {dimension_numbers = #tpu.dot_dimension_numbers<[1], [0], [0], [1], [0, 0, 1, 1], [], []>} : vector<128x128xbf16>, vector<128x128xbf16>, vector<128x128xf32> -> vector<128x128xf32>
    %55 = vector.broadcast %52 : vector<1x128xf32> to vector<128x128xf32>
    %56 = arith.addf %54, %55 : vector<128x128xf32>
    %cst_42 = arith.constant 0.000000e+00 : f32
    %57 = vector.broadcast %cst_42 : f32 to vector<128x128xf32>
    %58 = arith.maximumf %56, %57 : vector<128x128xf32>
    %c0_43 = arith.constant 0 : index
    %c0_44 = arith.constant 0 : index
    %59 = vector.load %arg10[%c0_43, %c0_44] : memref<128x128xbf16, #tpu.memory_space<vmem>>, vector<128x128xbf16>
    %c0_45 = arith.constant 0 : index
    %c0_46 = arith.constant 0 : index
    %60 = vector.load %arg11[%c0_45, %c0_46] : memref<1x128xf32, #tpu.memory_space<vmem>>, vector<1x128xf32>
    %61 = arith.truncf %58 : vector<128x128xf32> to vector<128x128xbf16>
    %cst_47 = arith.constant dense<0.000000e+00> : vector<128x128xf32>
    %62 = tpu.matmul %61, %59, %cst_47 {dimension_numbers = #tpu.dot_dimension_numbers<[1], [0], [0], [1], [0, 0, 1, 1], [], []>} : vector<128x128xbf16>, vector<128x128xbf16>, vector<128x128xf32> -> vector<128x128xf32>
    %63 = vector.broadcast %60 : vector<1x128xf32> to vector<128x128xf32>
    %64 = arith.addf %62, %63 : vector<128x128xf32>
    %cst_48 = arith.constant 0.000000e+00 : f32
    %65 = vector.broadcast %cst_48 : f32 to vector<128x128xf32>
    %66 = arith.maximumf %64, %65 : vector<128x128xf32>
    %c0_49 = arith.constant 0 : index
    %c0_50 = arith.constant 0 : index
    %67 = vector.load %arg12[%c0_49, %c0_50] : memref<128x128xbf16, #tpu.memory_space<vmem>>, vector<128x128xbf16>
    %c0_51 = arith.constant 0 : index
    %c0_52 = arith.constant 0 : index
    %68 = vector.load %arg13[%c0_51, %c0_52] : memref<1x128xf32, #tpu.memory_space<vmem>>, vector<1x128xf32>
    %69 = arith.truncf %66 : vector<128x128xf32> to vector<128x128xbf16>
    %cst_53 = arith.constant dense<0.000000e+00> : vector<128x128xf32>
    %70 = tpu.matmul %69, %67, %cst_53 {dimension_numbers = #tpu.dot_dimension_numbers<[1], [0], [0], [1], [0, 0, 1, 1], [], []>} : vector<128x128xbf16>, vector<128x128xbf16>, vector<128x128xf32> -> vector<128x128xf32>
    %71 = vector.broadcast %68 : vector<1x128xf32> to vector<128x128xf32>
    %72 = arith.addf %70, %71 : vector<128x128xf32>
    %73 = math.tanh %72 : vector<128x128xf32>
    %c0_54 = arith.constant 0 : index
    %c0_55 = arith.constant 0 : index
    %74 = vector.load %arg14[%c0_54, %c0_55] : memref<128x128xbf16, #tpu.memory_space<vmem>>, vector<128x128xbf16>
    %c0_56 = arith.constant 0 : index
    %c0_57 = arith.constant 0 : index
    %75 = vector.load %arg15[%c0_56, %c0_57] : memref<1x128xf32, #tpu.memory_space<vmem>>, vector<1x128xf32>
    %76 = arith.truncf %50 : vector<128x128xf32> to vector<128x128xbf16>
    %cst_58 = arith.constant dense<0.000000e+00> : vector<128x128xf32>
    %77 = tpu.matmul %76, %74, %cst_58 {dimension_numbers = #tpu.dot_dimension_numbers<[1], [0], [0], [1], [0, 0, 1, 1], [], []>} : vector<128x128xbf16>, vector<128x128xbf16>, vector<128x128xf32> -> vector<128x128xf32>
    %78 = vector.broadcast %75 : vector<1x128xf32> to vector<128x128xf32>
    %79 = arith.addf %77, %78 : vector<128x128xf32>
    %cst_59 = arith.constant 0.000000e+00 : f32
    %80 = vector.broadcast %cst_59 : f32 to vector<128x128xf32>
    %81 = arith.maximumf %79, %80 : vector<128x128xf32>
    %c0_60 = arith.constant 0 : index
    %c0_61 = arith.constant 0 : index
    %82 = vector.load %arg16[%c0_60, %c0_61] : memref<128x128xbf16, #tpu.memory_space<vmem>>, vector<128x128xbf16>
    %c0_62 = arith.constant 0 : index
    %c0_63 = arith.constant 0 : index
    %83 = vector.load %arg17[%c0_62, %c0_63] : memref<1x128xf32, #tpu.memory_space<vmem>>, vector<1x128xf32>
    %84 = arith.truncf %81 : vector<128x128xf32> to vector<128x128xbf16>
    %cst_64 = arith.constant dense<0.000000e+00> : vector<128x128xf32>
    %85 = tpu.matmul %84, %82, %cst_64 {dimension_numbers = #tpu.dot_dimension_numbers<[1], [0], [0], [1], [0, 0, 1, 1], [], []>} : vector<128x128xbf16>, vector<128x128xbf16>, vector<128x128xf32> -> vector<128x128xf32>
    %86 = vector.broadcast %83 : vector<1x128xf32> to vector<128x128xf32>
    %87 = arith.addf %85, %86 : vector<128x128xf32>
    %cst_65 = arith.constant dense<0xFF800000> : vector<128xf32>
    %88 = vector.multi_reduction <maximumf>, %87, %cst_65 [1] : vector<128x128xf32> to vector<128xf32>
    %89 = vector.shape_cast %88 : vector<128xf32> to vector<128x1xf32>
    %90 = vector.broadcast %89 : vector<128x1xf32> to vector<128x128xf32>
    %91 = arith.subf %87, %90 : vector<128x128xf32>
    %92 = math.exp %91 : vector<128x128xf32>
    %cst_66 = arith.constant dense<0.000000e+00> : vector<128xf32>
    %93 = vector.multi_reduction <add>, %92, %cst_66 [1] : vector<128x128xf32> to vector<128xf32>
    %94 = vector.shape_cast %93 : vector<128xf32> to vector<128x1xf32>
    %95 = vector.broadcast %94 : vector<128x1xf32> to vector<128x128xf32>
    %96 = arith.divf %92, %95 : vector<128x128xf32>
    %97 = arith.addf %96, %73 : vector<128x128xf32>
    %c0_67 = arith.constant 0 : index
    %c0_68 = arith.constant 0 : index
    %98 = vector.load %arg18[%c0_67, %c0_68] : memref<128x128xf32, #tpu.memory_space<vmem>>, vector<128x128xf32>
    tpu.vector_store %arg18[%c0_67, %c0_68], %97 {strides = array<i32>} : memref<128x128xf32, #tpu.memory_space<vmem>>, vector<128x128xf32>,
    return
  }
  func.func @transform_0(%arg0: i32) -> (i32, i32) {
    %c0_i32 = arith.constant 0 : i32
    %c0_i32_0 = arith.constant 0 : i32
    return %arg0, %c0_i32 : i32, i32
  }
  func.func @transform_1(%arg0: i32) -> (i32, i32) {
    %c0_i32 = arith.constant 0 : i32
    %c0_i32_0 = arith.constant 0 : i32
    %c0_i32_1 = arith.constant 0 : i32
    return %c0_i32, %c0_i32_0 : i32, i32
  }
  func.func @transform_2(%arg0: i32) -> (i32, i32) {
    %c0_i32 = arith.constant 0 : i32
    %c0_i32_0 = arith.constant 0 : i32
    %c0_i32_1 = arith.constant 0 : i32
    return %c0_i32, %c0_i32_0 : i32, i32
  }
  func.func @transform_3(%arg0: i32) -> (i32, i32, i32) {
    %c0_i32 = arith.constant 0 : i32
    %c0_i32_0 = arith.constant 0 : i32
    %c0_i32_1 = arith.constant 0 : i32
    %c0_i32_2 = arith.constant 0 : i32
    return %c0_i32, %c0_i32_0, %c0_i32_1 : i32, i32, i32
  }
  func.func @transform_4(%arg0: i32) -> (i32, i32, i32) {
    %c0_i32 = arith.constant 0 : i32
    %c0_i32_0 = arith.constant 0 : i32
    %c0_i32_1 = arith.constant 0 : i32
    %c0_i32_2 = arith.constant 0 : i32
    return %c0_i32, %c0_i32_0, %c0_i32_1 : i32, i32, i32
  }
  func.func @transform_5(%arg0: i32) -> (i32, i32, i32) {
    %c0_i32 = arith.constant 0 : i32
    %c0_i32_0 = arith.constant 0 : i32
    %c0_i32_1 = arith.constant 0 : i32
    %c0_i32_2 = arith.constant 0 : i32
    return %c0_i32, %c0_i32_0, %c0_i32_1 : i32, i32, i32
  }
  func.func @transform_6(%arg0: i32) -> (i32, i32, i32) {
    %c0_i32 = arith.constant 0 : i32
    %c0_i32_0 = arith.constant 0 : i32
    %c0_i32_1 = arith.constant 0 : i32
    %c0_i32_2 = arith.constant 0 : i32
    return %c0_i32, %c0_i32_0, %c0_i32_1 : i32, i32, i32
  }
  func.func @transform_7(%arg0: i32) -> (i32, i32) {
    %c0_i32 = arith.constant 0 : i32
    %c0_i32_0 = arith.constant 0 : i32
    %c0_i32_1 = arith.constant 0 : i32
    return %c0_i32, %c0_i32_0 : i32, i32
  }
  func.func @transform_8(%arg0: i32) -> (i32, i32) {
    %c0_i32 = arith.constant 0 : i32
    %c0_i32_0 = arith.constant 0 : i32
    %c0_i32_1 = arith.constant 0 : i32
    return %c0_i32, %c0_i32_0 : i32, i32
  }
  func.func @transform_9(%arg0: i32) -> (i32, i32) {
    %c0_i32 = arith.constant 0 : i32
    %c0_i32_0 = arith.constant 0 : i32
    %c0_i32_1 = arith.constant 0 : i32
    return %c0_i32, %c0_i32_0 : i32, i32
  }
  func.func @transform_10(%arg0: i32) -> (i32, i32) {
    %c0_i32 = arith.constant 0 : i32
    %c0_i32_0 = arith.constant 0 : i32
    %c0_i32_1 = arith.constant 0 : i32
    return %c0_i32, %c0_i32_0 : i32, i32
  }
  func.func @transform_11(%arg0: i32) -> (i32, i32) {
    %c0_i32 = arith.constant 0 : i32
    %c0_i32_0 = arith.constant 0 : i32
    %c0_i32_1 = arith.constant 0 : i32
    return %c0_i32, %c0_i32_0 : i32, i32
  }
  func.func @transform_12(%arg0: i32) -> (i32, i32) {
    %c0_i32 = arith.constant 0 : i32
    %c0_i32_0 = arith.constant 0 : i32
    %c0_i32_1 = arith.constant 0 : i32
    return %c0_i32, %c0_i32_0 : i32, i32
  }
  func.func @transform_13(%arg0: i32) -> (i32, i32) {
    %c0_i32 = arith.constant 0 : i32
    %c0_i32_0 = arith.constant 0 : i32
    %c0_i32_1 = arith.constant 0 : i32
    return %c0_i32, %c0_i32_0 : i32, i32
  }
  func.func @transform_14(%arg0: i32) -> (i32, i32) {
    %c0_i32 = arith.constant 0 : i32
    %c0_i32_0 = arith.constant 0 : i32
    %c0_i32_1 = arith.constant 0 : i32
    return %c0_i32, %c0_i32_0 : i32, i32
  }
  func.func @transform_15(%arg0: i32) -> (i32, i32) {
    %c0_i32 = arith.constant 0 : i32
    %c0_i32_0 = arith.constant 0 : i32
    %c0_i32_1 = arith.constant 0 : i32
    return %c0_i32, %c0_i32_0 : i32, i32
  }
  func.func @transform_16(%arg0: i32) -> (i32, i32) {
    %c0_i32 = arith.constant 0 : i32
    %c0_i32_0 = arith.constant 0 : i32
    %c0_i32_1 = arith.constant 0 : i32
    return %c0_i32, %c0_i32_0 : i32, i32
  }
  func.func @transform_17(%arg0: i32) -> (i32, i32) {
    %c0_i32 = arith.constant 0 : i32
    %c0_i32_0 = arith.constant 0 : i32
    return %arg0, %c0_i32 : i32, i32
  }
}

</mosaic_0001>

<llo_original>
// kernel: agent_forward.1
$region0: #{agent_forward.1}
  #allocation0 [shape = 'u32[]', space=smem, size = 0x4, offset = 0x4, fixed_abs, tag = 'smem constant byte address 0x4 - core index']
  #allocation1 [shape = 'u32[144,128]{1,0:T(1,128)}', space=vmem, size = 0x12000, scoped, tag = 'internal scratch']
  %s0 = inlined_call_operand.vmem [shape: f32[256,128], index: 0, kind: input, shape index: {}]
  %s1 = inlined_call_operand.vmem [shape: bf16[128,128], index: 1, kind: input, shape index: {}]
  %s2 = inlined_call_operand.vmem [shape: f32[1,128], index: 2, kind: input, shape index: {}]
  %s3 = inlined_call_operand.vmem [shape: bf16[2,128,128], index: 3, kind: input, shape index: {}]
  %s4 = inlined_call_operand.vmem [shape: f32[2,1,128], index: 4, kind: input, shape index: {}]
  %s5 = inlined_call_operand.vmem [shape: bf16[2,128,128], index: 5, kind: input, shape index: {}]
  %s6 = inlined_call_operand.vmem [shape: f32[2,1,128], index: 6, kind: input, shape index: {}]
  %s7 = inlined_call_operand.vmem [shape: bf16[128,128], index: 7, kind: input, shape index: {}]
  %s8 = inlined_call_operand.vmem [shape: f32[1,128], index: 8, kind: input, shape index: {}]
  %s9 = inlined_call_operand.vmem [shape: bf16[128,128], index: 9, kind: input, shape index: {}]
  %s10 = inlined_call_operand.vmem [shape: f32[1,128], index: 10, kind: input, shape index: {}]
  %s11 = inlined_call_operand.vmem [shape: bf16[128,128], index: 11, kind: input, shape index: {}]
  %s12 = inlined_call_operand.vmem [shape: f32[1,128], index: 12, kind: input, shape index: {}]
  %s13 = inlined_call_operand.vmem [shape: bf16[128,128], index: 13, kind: input, shape index: {}]
  %s14 = inlined_call_operand.vmem [shape: f32[1,128], index: 14, kind: input, shape index: {}]
  %s15 = inlined_call_operand.vmem [shape: bf16[128,128], index: 15, kind: input, shape index: {}]
  %s16 = inlined_call_operand.vmem [shape: f32[1,128], index: 16, kind: input, shape index: {}]
  %s17 = inlined_call_operand.vmem [shape: f32[256,128], index: 17, kind: output, shape index: {}]
  %s18 = sld [smem:[#allocation0]]
  $region101: #{agent_forward.1} parent=0
    _
  %s20 = ssub.s32 1, %s18
  %s21 = scalar_select 0, %s20, %s18
  loop: start=0, step=1, limit=4
  $region2: #{agent_forward.1} parent=0 // loop_pre_header
    _
  $region3: #{agent_forward.1} parent=0 // loop_header
    %s23 = sphi 0, %s27
    %p24 = scmp.ge.s32.totalorder %s23, 4
    %s33 = sphi 0, %s35
    %s36 = sphi 0, %s33
    %s37 = sphi 0, %s36
    %s53 = sphi 0, %s37
    %s57 = sphi 0, %s57
    %s59 = sphi 0, %s57
    %s60 = sphi 0, %s59
    %s74 = sphi 0, %s60
    %s78 = sphi 0, %s78
    %s80 = sphi 0, %s78
    %s81 = sphi 0, %s80
    %s95 = sphi 0, %s81
    %s99 = sphi 0, %s99
    %s101 = sphi 0, %s99
    %s102 = sphi 0, %s101
    %s116 = sphi 0, %s102
    %s120 = sphi 0, %s120
    %s122 = sphi 0, %s120
    %s123 = sphi 0, %s122
    %s137 = sphi 0, %s123
    %s141 = sphi 0, %s141
    %s143 = sphi 0, %s141
    %s144 = sphi 0, %s143
    %s158 = sphi 0, %s144
    %s162 = sphi 0, %s162
    %s164 = sphi 0, %s162
    %s165 = sphi 0, %s164
    %s179 = sphi 0, %s165
    %s183 = sphi 0, %s183
    %s185 = sphi 0, %s183
    %s186 = sphi 0, %s185
    %s200 = sphi 0, %s186
    %s204 = sphi 0, %s204
    %s206 = sphi 0, %s204
    %s207 = sphi 0, %s206
    %s221 = sphi 0, %s207
    %s225 = sphi 0, %s225
    %s227 = sphi 0, %s225
    %s228 = sphi 0, %s227
    %s242 = sphi 0, %s228
    %s246 = sphi 0, %s246
    %s248 = sphi 0, %s246
    %s249 = sphi 0, %s248
    %s263 = sphi 0, %s249
    %s267 = sphi 0, %s267
    %s269 = sphi 0, %s267
    %s270 = sphi 0, %s269
    %s284 = sphi 0, %s270
    %s288 = sphi 0, %s288
    %s290 = sphi 0, %s288
    %s291 = sphi 0, %s290
    %s305 = sphi 0, %s291
    %s309 = sphi 0, %s309
    %s311 = sphi 0, %s309
    %s312 = sphi 0, %s311
    %s326 = sphi 0, %s312
    %s330 = sphi 0, %s330
    %s332 = sphi 0, %s330
    %s333 = sphi 0, %s332
    %s347 = sphi 0, %s333
    %s351 = sphi 0, %s351
    %s353 = sphi 0, %s351
    %s354 = sphi 0, %s353
    %s368 = sphi 0, %s354
    %s372 = sphi 0, %s372
    %s374 = sphi 0, %s372
    %s375 = sphi 0, %s374
    %s389 = sphi 0, %s375
    %s395 = sphi 0, %s397
    %s398 = sphi 0, %s395
    %s399 = sphi 0, %s398
    %s415 = sphi 0, %s399
  $region4: #{agent_forward.1} parent=0 // loop_header_branch
    %26 = sbr.rel (%p24) target = $region8
  $region5: #{agent_forward.1} parent=0 // loop_body
    %s28 = ssub.s32 %s23, 1
    %s29 = ssub.s32 %s23, 2
    %s30 = sadd.s32 %s23, 1
    %s31 = ssub.s32 %s23, %s30
    %p32 = scmp.eq.s32.totalorder %s31, 0
    %s34 = sadd.s32 %s33, 1
    %s35 = scalar_select %p32, %s33, %s34
    %p38 = pneg %p32
    %p39 = scmp.eq.s32.totalorder %s23, 1
    %p40 = por %p38, %p39
    %p41 = scmp.ne.s32.totalorder %s33, %s36
    %p42 = scmp.eq.s32.totalorder %s23, 0
    %p43 = por %p41, %p42
    %p44 = scmp.ne.s32.totalorder %s33, %s36
    %p45 = scmp.eq.s32.totalorder %s28, 1
    %p46 = por %p44, %p45
    %p47 = scmp.ne.s32.totalorder %s36, %s37
    %p48 = scmp.eq.s32.totalorder %s28, 0
    %p49 = por %p47, %p48
    %p50 = scmp.ne.s32.totalorder %s36, %s37
    %p51 = scmp.eq.s32.totalorder %s29, 1
    %p52 = por %p50, %p51
    %p54 = scmp.ne.s32.totalorder %s37, %s53
    %p55 = scmp.eq.s32.totalorder %s29, 0
    %p56 = por %p54, %p55
    %s58 = sadd.s32 %s57, 1
    %p61 = scmp.eq.s32.totalorder %s23, 1
    %p62 = scmp.ne.s32.totalorder %s57, %s59
    %p63 = scmp.eq.s32.totalorder %s23, 0
    %p64 = por %p62, %p63
    %p65 = scmp.ne.s32.totalorder %s57, %s59
    %p66 = scmp.eq.s32.totalorder %s28, 1
    %p67 = por %p65, %p66
    %p68 = scmp.ne.s32.totalorder %s59, %s60
    %p69 = scmp.eq.s32.totalorder %s28, 0
    %p70 = por %p68, %p69
    %p71 = scmp.ne.s32.totalorder %s59, %s60
    %p72 = scmp.eq.s32.totalorder %s29, 1
    %p73 = por %p71, %p72
    %p75 = scmp.ne.s32.totalorder %s60, %s74
    %p76 = scmp.eq.s32.totalorder %s29, 0
    %p77 = por %p75, %p76
    %s79 = sadd.s32 %s78, 1
    %p82 = scmp.eq.s32.totalorder %s23, 1
    %p83 = scmp.ne.s32.totalorder %s78, %s80
    %p84 = scmp.eq.s32.totalorder %s23, 0
    %p85 = por %p83, %p84
    %p86 = scmp.ne.s32.totalorder %s78, %s80
    %p87 = scmp.eq.s32.totalorder %s28, 1
    %p88 = por %p86, %p87
    %p89 = scmp.ne.s32.totalorder %s80, %s81
    %p90 = scmp.eq.s32.totalorder %s28, 0
    %p91 = por %p89, %p90
    %p92 = scmp.ne.s32.totalorder %s80, %s81
    %p93 = scmp.eq.s32.totalorder %s29, 1
    %p94 = por %p92, %p93
    %p96 = scmp.ne.s32.totalorder %s81, %s95
    %p97 = scmp.eq.s32.totalorder %s29, 0
    %p98 = por %p96, %p97
    %s100 = sadd.s32 %s99, 1
    %p103 = scmp.eq.s32.totalorder %s23, 1
    %p104 = scmp.ne.s32.totalorder %s99, %s101
    %p105 = scmp.eq.s32.totalorder %s23, 0
    %p106 = por %p104, %p105
    %p107 = scmp.ne.s32.totalorder %s99, %s101
    %p108 = scmp.eq.s32.totalorder %s28, 1
    %p109 = por %p107, %p108
    %p110 = scmp.ne.s32.totalorder %s101, %s102
    %p111 = scmp.eq.s32.totalorder %s28, 0
    %p112 = por %p110, %p111
    %p113 = scmp.ne.s32.totalorder %s101, %s102
    %p114 = scmp.eq.s32.totalorder %s29, 1
    %p115 = por %p113, %p114
    %p117 = scmp.ne.s32.totalorder %s102, %s116
    %p118 = scmp.eq.s32.totalorder %s29, 0
    %p119 = por %p117, %p118
    %s121 = sadd.s32 %s120, 1
    %p124 = scmp.eq.s32.totalorder %s23, 1
    %p125 = scmp.ne.s32.totalorder %s120, %s122
    %p126 = scmp.eq.s32.totalorder %s23, 0
    %p127 = por %p125, %p126
    %p128 = scmp.ne.s32.totalorder %s120, %s122
    %p129 = scmp.eq.s32.totalorder %s28, 1
    %p130 = por %p128, %p129
    %p131 = scmp.ne.s32.totalorder %s122, %s123
    %p132 = scmp.eq.s32.totalorder %s28, 0
    %p133 = por %p131, %p132
    %p134 = scmp.ne.s32.totalorder %s122, %s123
    %p135 = scmp.eq.s32.totalorder %s29, 1
    %p136 = por %p134, %p135
    %p138 = scmp.ne.s32.totalorder %s123, %s137
    %p139 = scmp.eq.s32.totalorder %s29, 0
    %p140 = por %p138, %p139
    %s142 = sadd.s32 %s141, 1
    %p145 = scmp.eq.s32.totalorder %s23, 1
    %p146 = scmp.ne.s32.totalorder %s141, %s143
    %p147 = scmp.eq.s32.totalorder %s23, 0
    %p148 = por %p146, %p147
    %p149 = scmp.ne.s32.totalorder %s141, %s143
    %p150 = scmp.eq.s32.totalorder %s28, 1
    %p151 = por %p149, %p150
    %p152 = scmp.ne.s32.totalorder %s143, %s144
    %p153 = scmp.eq.s32.totalorder %s28, 0
    %p154 = por %p152, %p153
    %p155 = scmp.ne.s32.totalorder %s143, %s144
    %p156 = scmp.eq.s32.totalorder %s29, 1
    %p157 = por %p155, %p156
    %p159 = scmp.ne.s32.totalorder %s144, %s158
    %p160 = scmp.eq.s32.totalorder %s29, 0
    %p161 = por %p159, %p160
    %s163 = sadd.s32 %s162, 1
    %p166 = scmp.eq.s32.totalorder %s23, 1
    %p167 = scmp.ne.s32.totalorder %s162, %s164
    %p168 = scmp.eq.s32.totalorder %s23, 0
    %p169 = por %p167, %p168
    %p170 = scmp.ne.s32.totalorder %s162, %s164
    %p171 = scmp.eq.s32.totalorder %s28, 1
    %p172 = por %p170, %p171
    %p173 = scmp.ne.s32.totalorder %s164, %s165
    %p174 = scmp.eq.s32.totalorder %s28, 0
    %p175 = por %p173, %p174
    %p176 = scmp.ne.s32.totalorder %s164, %s165
    %p177 = scmp.eq.s32.totalorder %s29, 1
    %p178 = por %p176, %p177
    %p180 = scmp.ne.s32.totalorder %s165, %s179
    %p181 = scmp.eq.s32.totalorder %s29, 0
    %p182 = por %p180, %p181
    %s184 = sadd.s32 %s183, 1
    %p187 = scmp.eq.s32.totalorder %s23, 1
    %p188 = scmp.ne.s32.totalorder %s183, %s185
    %p189 = scmp.eq.s32.totalorder %s23, 0
    %p190 = por %p188, %p189
    %p191 = scmp.ne.s32.totalorder %s183, %s185
    %p192 = scmp.eq.s32.totalorder %s28, 1
    %p193 = por %p191, %p192
    %p194 = scmp.ne.s32.totalorder %s185, %s186
    %p195 = scmp.eq.s32.totalorder %s28, 0
    %p196 = por %p194, %p195
    %p197 = scmp.ne.s32.totalorder %s185, %s186
    %p198 = scmp.eq.s32.totalorder %s29, 1
    %p199 = por %p197, %p198
    %p201 = scmp.ne.s32.totalorder %s186, %s200
    %p202 = scmp.eq.s32.totalorder %s29, 0
    %p203 = por %p201, %p202
    %s205 = sadd.s32 %s204, 1
    %p208 = scmp.eq.s32.totalorder %s23, 1
    %p209 = scmp.ne.s32.totalorder %s204, %s206
    %p210 = scmp.eq.s32.totalorder %s23, 0
    %p211 = por %p209, %p210
    %p212 = scmp.ne.s32.totalorder %s204, %s206
    %p213 = scmp.eq.s32.totalorder %s28, 1
    %p214 = por %p212, %p213
    %p215 = scmp.ne.s32.totalorder %s206, %s207
    %p216 = scmp.eq.s32.totalorder %s28, 0
    %p217 = por %p215, %p216
    %p218 = scmp.ne.s32.totalorder %s206, %s207
    %p219 = scmp.eq.s32.totalorder %s29, 1
    %p220 = por %p218, %p219
    %p222 = scmp.ne.s32.totalorder %s207, %s221
    %p223 = scmp.eq.s32.totalorder %s29, 0
    %p224 = por %p222, %p223
    %s226 = sadd.s32 %s225, 1
    %p229 = scmp.eq.s32.totalorder %s23, 1
    %p230 = scmp.ne.s32.totalorder %s225, %s227
    %p231 = scmp.eq.s32.totalorder %s23, 0
    %p232 = por %p230, %p231
    %p233 = scmp.ne.s32.totalorder %s225, %s227
    %p234 = scmp.eq.s32.totalorder %s28, 1
    %p235 = por %p233, %p234
    %p236 = scmp.ne.s32.totalorder %s227, %s228
    %p237 = scmp.eq.s32.totalorder %s28, 0
    %p238 = por %p236, %p237
    %p239 = scmp.ne.s32.totalorder %s227, %s228
    %p240 = scmp.eq.s32.totalorder %s29, 1
    %p241 = por %p239, %p240
    %p243 = scmp.ne.s32.totalorder %s228, %s242
    %p244 = scmp.eq.s32.totalorder %s29, 0
    %p245 = por %p243, %p244
    %s247 = sadd.s32 %s246, 1
    %p250 = scmp.eq.s32.totalorder %s23, 1
    %p251 = scmp.ne.s32.totalorder %s246, %s248
    %p252 = scmp.eq.s32.totalorder %s23, 0
    %p253 = por %p251, %p252
    %p254 = scmp.ne.s32.totalorder %s246, %s248
    %p255 = scmp.eq.s32.totalorder %s28, 1
    %p256 = por %p254, %p255
    %p257 = scmp.ne.s32.totalorder %s248, %s249
    %p258 = scmp.eq.s32.totalorder %s28, 0
    %p259 = por %p257, %p258
    %p260 = scmp.ne.s32.totalorder %s248, %s249
    %p261 = scmp.eq.s32.totalorder %s29, 1
    %p262 = por %p260, %p261
    %p264 = scmp.ne.s32.totalorder %s249, %s263
    %p265 = scmp.eq.s32.totalorder %s29, 0
    %p266 = por %p264, %p265
    %s268 = sadd.s32 %s267, 1
    %p271 = scmp.eq.s32.totalorder %s23, 1
    %p272 = scmp.ne.s32.totalorder %s267, %s269
    %p273 = scmp.eq.s32.totalorder %s23, 0
    %p274 = por %p272, %p273
    %p275 = scmp.ne.s32.totalorder %s267, %s269
    %p276 = scmp.eq.s32.totalorder %s28, 1
    %p277 = por %p275, %p276
    %p278 = scmp.ne.s32.totalorder %s269, %s270
    %p279 = scmp.eq.s32.totalorder %s28, 0
    %p280 = por %p278, %p279
    %p281 = scmp.ne.s32.totalorder %s269, %s270
    %p282 = scmp.eq.s32.totalorder %s29, 1
    %p283 = por %p281, %p282
    %p285 = scmp.ne.s32.totalorder %s270, %s284
    %p286 = scmp.eq.s32.totalorder %s29, 0
    %p287 = por %p285, %p286
    %s289 = sadd.s32 %s288, 1
    %p292 = scmp.eq.s32.totalorder %s23, 1
    %p293 = scmp.ne.s32.totalorder %s288, %s290
    %p294 = scmp.eq.s32.totalorder %s23, 0
    %p295 = por %p293, %p294
    %p296 = scmp.ne.s32.totalorder %s288, %s290
    %p297 = scmp.eq.s32.totalorder %s28, 1
    %p298 = por %p296, %p297
    %p299 = scmp.ne.s32.totalorder %s290, %s291
    %p300 = scmp.eq.s32.totalorder %s28, 0
    %p301 = por %p299, %p300
    %p302 = scmp.ne.s32.totalorder %s290, %s291
    %p303 = scmp.eq.s32.totalorder %s29, 1
    %p304 = por %p302, %p303
    %p306 = scmp.ne.s32.totalorder %s291, %s305
    %p307 = scmp.eq.s32.totalorder %s29, 0
    %p308 = por %p306, %p307
    %s310 = sadd.s32 %s309, 1
    %p313 = scmp.eq.s32.totalorder %s23, 1
    %p314 = scmp.ne.s32.totalorder %s309, %s311
    %p315 = scmp.eq.s32.totalorder %s23, 0
    %p316 = por %p314, %p315
    %p317 = scmp.ne.s32.totalorder %s309, %s311
    %p318 = scmp.eq.s32.totalorder %s28, 1
    %p319 = por %p317, %p318
    %p320 = scmp.ne.s32.totalorder %s311, %s312
    %p321 = scmp.eq.s32.totalorder %s28, 0
    %p322 = por %p320, %p321
    %p323 = scmp.ne.s32.totalorder %s311, %s312
    %p324 = scmp.eq.s32.totalorder %s29, 1
    %p325 = por %p323, %p324
    %p327 = scmp.ne.s32.totalorder %s312, %s326
    %p328 = scmp.eq.s32.totalorder %s29, 0
    %p329 = por %p327, %p328
    %s331 = sadd.s32 %s330, 1
    %p334 = scmp.eq.s32.totalorder %s23, 1
    %p335 = scmp.ne.s32.totalorder %s330, %s332
    %p336 = scmp.eq.s32.totalorder %s23, 0
    %p337 = por %p335, %p336
    %p338 = scmp.ne.s32.totalorder %s330, %s332
    %p339 = scmp.eq.s32.totalorder %s28, 1
    %p340 = por %p338, %p339
    %p341 = scmp.ne.s32.totalorder %s332, %s333
    %p342 = scmp.eq.s32.totalorder %s28, 0
    %p343 = por %p341, %p342
    %p344 = scmp.ne.s32.totalorder %s332, %s333
    %p345 = scmp.eq.s32.totalorder %s29, 1
    %p346 = por %p344, %p345
    %p348 = scmp.ne.s32.totalorder %s333, %s347
    %p349 = scmp.eq.s32.totalorder %s29, 0
    %p350 = por %p348, %p349
    %s352 = sadd.s32 %s351, 1
    %p355 = scmp.eq.s32.totalorder %s23, 1
    %p356 = scmp.ne.s32.totalorder %s351, %s353
    %p357 = scmp.eq.s32.totalorder %s23, 0
    %p358 = por %p356, %p357
    %p359 = scmp.ne.s32.totalorder %s351, %s353
    %p360 = scmp.eq.s32.totalorder %s28, 1
    %p361 = por %p359, %p360
    %p362 = scmp.ne.s32.totalorder %s353, %s354
    %p363 = scmp.eq.s32.totalorder %s28, 0
    %p364 = por %p362, %p363
    %p365 = scmp.ne.s32.totalorder %s353, %s354
    %p366 = scmp.eq.s32.totalorder %s29, 1
    %p367 = por %p365, %p366
    %p369 = scmp.ne.s32.totalorder %s354, %s368
    %p370 = scmp.eq.s32.totalorder %s29, 0
    %p371 = por %p369, %p370
    %s373 = sadd.s32 %s372, 1
    %p376 = scmp.eq.s32.totalorder %s23, 1
    %p377 = scmp.ne.s32.totalorder %s372, %s374
    %p378 = scmp.eq.s32.totalorder %s23, 0
    %p379 = por %p377, %p378
    %p380 = scmp.ne.s32.totalorder %s372, %s374
    %p381 = scmp.eq.s32.totalorder %s28, 1
    %p382 = por %p380, %p381
    %p383 = scmp.ne.s32.totalorder %s374, %s375
    %p384 = scmp.eq.s32.totalorder %s28, 0
    %p385 = por %p383, %p384
    %p386 = scmp.ne.s32.totalorder %s374, %s375
    %p387 = scmp.eq.s32.totalorder %s29, 1
    %p388 = por %p386, %p387
    %p390 = scmp.ne.s32.totalorder %s375, %s389
    %p391 = scmp.eq.s32.totalorder %s29, 0
    %p392 = por %p390, %p391
    %s393 = ssub.s32 %s23, %s30
    %p394 = scmp.eq.s32.totalorder %s393, 0
    %s396 = sadd.s32 %s395, 1
    %s397 = scalar_select %p394, %s395, %s396
    %p400 = pneg %p394
    %p401 = scmp.eq.s32.totalorder %s23, 1
    %p402 = por %p400, %p401
    %p403 = scmp.ne.s32.totalorder %s395, %s398
    %p404 = scmp.eq.s32.totalorder %s23, 0
    %p405 = por %p403, %p404
    %p406 = scmp.ne.s32.totalorder %s395, %s398
    %p407 = scmp.eq.s32.totalorder %s28, 1
    %p408 = por %p406, %p407
    %p409 = scmp.ne.s32.totalorder %s398, %s399
    %p410 = scmp.eq.s32.totalorder %s28, 0
    %p411 = por %p409, %p410
    %p412 = scmp.ne.s32.totalorder %s398, %s399
    %p413 = scmp.eq.s32.totalorder %s29, 1
    %p414 = por %p412, %p413
    %p416 = scmp.ne.s32.totalorder %s399, %s415
    %p417 = scmp.eq.s32.totalorder %s29, 0
    %p418 = por %p416, %p417
    %p419 = scmp.le.s32.totalorder 1, %s23
    %p420 = scmp.lt.s32.totalorder %s23, 3
    %p421 = pnand %p419, %p420
    %p422 = pneg %p421
    // Predicated region
    $region9: #{agent_forward.1} parent=5 // pred_check
      _
    $region10: #{agent_forward.1} parent=5 // pred_check_branch
      %424 = sbr.rel (%p421) target = $region12
    $region11: #{agent_forward.1} parent=5 // pred_region
      %s425 = ssub.s32 %s23, 1
      // Predicated region
      $region13: #{agent_forward.1} parent=11 // pred_check
        %p426 = pneg %p70
      $region14: #{agent_forward.1} parent=11 // pred_check_branch
        %428 = sbr.rel (%p426) target = $region16
      $region15: #{agent_forward.1} parent=11 // pred_region
        _
      $region16: #{agent_forward.1} parent=11 // pred_fallthru
        _
      // Predicated region
      $region17: #{agent_forward.1} parent=11 // pred_check
        %p429 = pneg %p91
      $region18: #{agent_forward.1} parent=11 // pred_check_branch
        %431 = sbr.rel (%p429) target = $region20
      $region19: #{agent_forward.1} parent=11 // pred_region
        _
      $region20: #{agent_forward.1} parent=11 // pred_fallthru
        _
      // Predicated region
      $region21: #{agent_forward.1} parent=11 // pred_check
        %p432 = pneg %p112
      $region22: #{agent_forward.1} parent=11 // pred_check_branch
        %434 = sbr.rel (%p432) target = $region24
      $region23: #{agent_forward.1} parent=11 // pred_region
        _
      $region24: #{agent_forward.1} parent=11 // pred_fallthru
        _
      // Predicated region
      $region25: #{agent_forward.1} parent=11 // pred_check
        %p435 = pneg %p133
      $region26: #{agent_forward.1} parent=11 // pred_check_branch
        %437 = sbr.rel (%p435) target = $region28
      $region27: #{agent_forward.1} parent=11 // pred_region
        _
      $region28: #{agent_forward.1} parent=11 // pred_fallthru
        _
      // Predicated region
      $region29: #{agent_forward.1} parent=11 // pred_check
        %p438 = pneg %p154
      $region30: #{agent_forward.1} parent=11 // pred_check_branch
        %440 = sbr.rel (%p438) target = $region32
      $region31: #{agent_forward.1} parent=11 // pred_region
        _
      $region32: #{agent_forward.1} parent=11 // pred_fallthru
        _
      // Predicated region
      $region33: #{agent_forward.1} parent=11 // pred_check
        %p441 = pneg %p175
      $region34: #{agent_forward.1} parent=11 // pred_check_branch
        %443 = sbr.rel (%p441) target = $region36
      $region35: #{agent_forward.1} parent=11 // pred_region
        _
      $region36: #{agent_forward.1} parent=11 // pred_fallthru
        _
      // Predicated region
      $region37: #{agent_forward.1} parent=11 // pred_check
        %p444 = pneg %p196
      $region38: #{agent_forward.1} parent=11 // pred_check_branch
        %446 = sbr.rel (%p444) target = $region40
      $region39: #{agent_forward.1} parent=11 // pred_region
        _
      $region40: #{agent_forward.1} parent=11 // pred_fallthru
        _
      // Predicated region
      $region41: #{agent_forward.1} parent=11 // pred_check
        %p447 = pneg %p217
      $region42: #{agent_forward.1} parent=11 // pred_check_branch
        %449 = sbr.rel (%p447) target = $region44
      $region43: #{agent_forward.1} parent=11 // pred_region
        _
      $region44: #{agent_forward.1} parent=11 // pred_fallthru
        _
      // Predicated region
      $region45: #{agent_forward.1} parent=11 // pred_check
        %p450 = pneg %p238
      $region46: #{agent_forward.1} parent=11 // pred_check_branch
        %452 = sbr.rel (%p450) target = $region48
      $region47: #{agent_forward.1} parent=11 // pred_region
        _
      $region48: #{agent_forward.1} parent=11 // pred_fallthru
        _
      // Predicated region
      $region49: #{agent_forward.1} parent=11 // pred_check
        %p453 = pneg %p259
      $region50: #{agent_forward.1} parent=11 // pred_check_branch
        %455 = sbr.rel (%p453) target = $region52
      $region51: #{agent_forward.1} parent=11 // pred_region
        _
      $region52: #{agent_forward.1} parent=11 // pred_fallthru
        _
      // Predicated region
      $region53: #{agent_forward.1} parent=11 // pred_check
        %p456 = pneg %p280
      $region54: #{agent_forward.1} parent=11 // pred_check_branch
        %458 = sbr.rel (%p456) target = $region56
      $region55: #{agent_forward.1} parent=11 // pred_region
        _
      $region56: #{agent_forward.1} parent=11 // pred_fallthru
        _
      // Predicated region
      $region57: #{agent_forward.1} parent=11 // pred_check
        %p459 = pneg %p301
      $region58: #{agent_forward.1} parent=11 // pred_check_branch
        %461 = sbr.rel (%p459) target = $region60
      $region59: #{agent_forward.1} parent=11 // pred_region
        _
      $region60: #{agent_forward.1} parent=11 // pred_fallthru
        _
      // Predicated region
      $region61: #{agent_forward.1} parent=11 // pred_check
        %p462 = pneg %p322
      $region62: #{agent_forward.1} parent=11 // pred_check_branch
        %464 = sbr.rel (%p462) target = $region64
      $region63: #{agent_forward.1} parent=11 // pred_region
        _
      $region64: #{agent_forward.1} parent=11 // pred_fallthru
        _
      // Predicated region
      $region65: #{agent_forward.1} parent=11 // pred_check
        %p465 = pneg %p343
      $region66: #{agent_forward.1} parent=11 // pred_check_branch
        %467 = sbr.rel (%p465) target = $region68
      $region67: #{agent_forward.1} parent=11 // pred_region
        _
      $region68: #{agent_forward.1} parent=11 // pred_fallthru
        _
      // Predicated region
      $region69: #{agent_forward.1} parent=11 // pred_check
        %p468 = pneg %p364
      $region70: #{agent_forward.1} parent=11 // pred_check_branch
        %470 = sbr.rel (%p468) target = $region72
      $region71: #{agent_forward.1} parent=11 // pred_region
        _
      $region72: #{agent_forward.1} parent=11 // pred_fallthru
        _
      // Predicated region
      $region73: #{agent_forward.1} parent=11 // pred_check
        %p471 = pneg %p385
      $region74: #{agent_forward.1} parent=11 // pred_check_branch
        %473 = sbr.rel (%p471) target = $region76
      $region75: #{agent_forward.1} parent=11 // pred_region
        _
      $region76: #{agent_forward.1} parent=11 // pred_fallthru
        _
    $region12: #{agent_forward.1} parent=5 // pred_fallthru
      _
    %p474 = scmp.lt.s32.totalorder %s23, 2
    // Predicated region
    $region77: #{agent_forward.1} parent=5 // pred_check
      %p475 = pneg %p474
    $region78: #{agent_forward.1} parent=5 // pred_check_branch
      %477 = sbr.rel (%p475) target = $region80
    $region79: #{agent_forward.1} parent=5 // pred_region
      // Predicated region
      $region81: #{agent_forward.1} parent=79 // pred_check
        %p478 = pneg %p43
      $region82: #{agent_forward.1} parent=79 // pred_check_branch
        %480 = sbr.rel (%p478) target = $region84
      $region83: #{agent_forward.1} parent=79 // pred_region
        %s481 = smul.u32 16, %s23
        %p482 = scmp.lt.s32.totalorder %s481, 31
        %s483 = scalar_select %p482, %s481, 31
        %s484 = smul.addr %s483, 8
        %s485 = scalar_lea.vmem %s0, %s484
        %s486 = smul.u32 16, %s23
      $region84: #{agent_forward.1} parent=79 // pred_fallthru
        _
    $region80: #{agent_forward.1} parent=5 // pred_fallthru
      _
    %p487 = scmp.le.s32.totalorder 1, %s23
    %p488 = scmp.lt.s32.totalorder %s23, 3
    %p489 = pnand %p487, %p488
    %p490 = pneg %p489
    // Predicated region
    $region85: #{agent_forward.1} parent=5 // pred_check
      _
    $region86: #{agent_forward.1} parent=5 // pred_check_branch
      %492 = sbr.rel (%p489) target = $region88
    $region87: #{agent_forward.1} parent=5 // pred_region
      %s493 = ssub.s32 %s23, 1
      %s494 = smul.u32 16, %s28
      %p495 = scmp.lt.s32.totalorder %s494, 31
      %s496 = scalar_select %p495, %s494, 31
      %s497 = smul.addr %s496, 8
      %s498 = scalar_lea.vmem %s0, %s497
      %p499 = pneg %p49
      %p500 = pneg %p46
      %p501 = pneg %p70
      %p502 = pneg %p67
      %p503 = pneg %p91
      %p504 = pneg %p88
      %p505 = pneg %p112
      %p506 = pneg %p109
      %p507 = pneg %p133
      %p508 = pneg %p130
      %p509 = pneg %p154
      %p510 = pneg %p151
      %p511 = pneg %p175
      %p512 = pneg %p172
      %p513 = pneg %p196
      %p514 = pneg %p193
      %p515 = pneg %p217
      %p516 = pneg %p214
      %p517 = pneg %p238
      %p518 = pneg %p235
      %p519 = pneg %p259
      %p520 = pneg %p256
      %p521 = pneg %p280
      %p522 = pneg %p277
      %p523 = pneg %p301
      %p524 = pneg %p298
      %p525 = pneg %p322
      %p526 = pneg %p319
      %p527 = pneg %p343
      %p528 = pneg %p340
      %p529 = pneg %p364
      %p530 = pneg %p361
      %p531 = pneg %p385
      %p532 = pneg %p382
      %p533 = pneg %p411
      %p534 = pneg %p408
      %s535 = smul.u32 16, %s28
      %p536 = scmp.lt.s32.totalorder %s535, 31
      %s537 = scalar_select %p536, %s535, 31
      %s538 = smul.addr %s537, 8
      %s539 = scalar_lea.vmem %s17, %s538
      %s540 = smul.u32 16, %s28
      %p541 = scmp.lt.s32.totalorder %s540, 31
      %s542 = scalar_select %p541, %s540, 31
      %s543 = smul.addr %s542, 8
      %s544 = scalar_lea.vmem %s0, %s543
      %s545 = smul.u32 16, %s28
      %s546 = smul.u32 16, %s28
      %p547 = scmp.lt.s32.totalorder %s546, 31
      %s548 = scalar_select %p547, %s546, 31
      %s549 = smul.addr %s548, 8
      %s550 = scalar_lea.vmem %s17, %s549
      %s551 = smul.u32 16, %s28
      %v553 = vld [vmem:[%s544] sm:$0xff]
      %v554 = vld [vmem:[%s544 + $0x8] sm:$0xff]
      %v555 = vld [vmem:[%s544 + $0x10] sm:$0xff]
      %v556 = vld [vmem:[%s544 + $0x18] sm:$0xff]
      %v557 = vld [vmem:[%s544 + $0x20] sm:$0xff]
      %v558 = vld [vmem:[%s544 + $0x28] sm:$0xff]
      %v559 = vld [vmem:[%s544 + $0x30] sm:$0xff]
      %v560 = vld [vmem:[%s544 + $0x38] sm:$0xff]
      %v561 = vld [vmem:[%s544 + $0x40] sm:$0xff]
      %v562 = vld [vmem:[%s544 + $0x48] sm:$0xff]
      %v563 = vld [vmem:[%s544 + $0x50] sm:$0xff]
      %v564 = vld [vmem:[%s544 + $0x58] sm:$0xff]
      %v565 = vld [vmem:[%s544 + $0x60] sm:$0xff]
      %v566 = vld [vmem:[%s544 + $0x68] sm:$0xff]
      %v567 = vld [vmem:[%s544 + $0x70] sm:$0xff]
      %v568 = vld [vmem:[%s544 + $0x78] sm:$0xff]
      %v569 = vld [vmem:[%s1] sm:$0xf]
      %v570 = vld [vmem:[%s1 + $0x4] sm:$0xf]
      %v571 = vld [vmem:[%s1 + $0x8] sm:$0xf]
      %v572 = vld [vmem:[%s1 + $0xc] sm:$0xf]
      %v573 = vld [vmem:[%s1 + $0x10] sm:$0xf]
      %v574 = vld [vmem:[%s1 + $0x14] sm:$0xf]
      %v575 = vld [vmem:[%s1 + $0x18] sm:$0xf]
      %v576 = vld [vmem:[%s1 + $0x1c] sm:$0xf]
      %v577 = vld [vmem:[%s1 + $0x20] sm:$0xf]
      %v578 = vld [vmem:[%s1 + $0x24] sm:$0xf]
      %v579 = vld [vmem:[%s1 + $0x28] sm:$0xf]
      %v580 = vld [vmem:[%s1 + $0x2c] sm:$0xf]
      %v581 = vld [vmem:[%s1 + $0x30] sm:$0xf]
      %v582 = vld [vmem:[%s1 + $0x34] sm:$0xf]
      %v583 = vld [vmem:[%s1 + $0x38] sm:$0xf]
      %v584 = vld [vmem:[%s1 + $0x3c] sm:$0xf]
      %v585 = vld [vmem:[%s2] sm:$0x1]
      %v586 = vpack.c.bf16 %v554, %v553
      %v587 = vpack.c.bf16 %v556, %v555
      %v588 = vpack.c.bf16 %v558, %v557
      %v589 = vpack.c.bf16 %v560, %v559
      %v590 = vpack.c.bf16 %v562, %v561
      %v591 = vpack.c.bf16 %v564, %v563
      %v592 = vpack.c.bf16 %v566, %v565
      %v593 = vpack.c.bf16 %v568, %v567
      %v595 = vlaneseq
      %v596 = vshrl.u32 %v595, 7
      %v597 = vsub.s32 0, %v596
      %v598 = vrot.slane %v585, %v597
      %v616 = vunpack.c.l.b16 %v569
      %v617 = vunpack.c.l.b16 %v570
      %v618 = vunpack.c.l.b16 %v571
      %v619 = vunpack.c.l.b16 %v572
      %v620 = vunpack.c.l.b16 %v573
      %v621 = vunpack.c.l.b16 %v574
      %v622 = vunpack.c.l.b16 %v575
      %v623 = vunpack.c.l.b16 %v576
      %v624 = vunpack.c.l.b16 %v577
      %v625 = vunpack.c.l.b16 %v578
      %v626 = vunpack.c.l.b16 %v579
      %v627 = vunpack.c.l.b16 %v580
      %v628 = vunpack.c.l.b16 %v581
      %v629 = vunpack.c.l.b16 %v582
      %v630 = vunpack.c.l.b16 %v583
      %v631 = vunpack.c.l.b16 %v584
      %v632 = vpack.c.b16 %v617, %v616
      %v633 = vpack.c.b16 %v619, %v618
      %v634 = vpack.c.b16 %v621, %v620
      %v635 = vpack.c.b16 %v623, %v622
      %v636 = vpack.c.b16 %v625, %v624
      %v637 = vpack.c.b16 %v627, %v626
      %v638 = vpack.c.b16 %v629, %v628
      %v639 = vpack.c.b16 %v631, %v630
      %648 = vmatprep.subr.bf16.mxu0 0
      %649 = vmatpush1.bf16.msra.mxu0 %v632
      %650 = vmatprep.subr.bf16.mxu0 0
      %651 = vmatpush1.bf16.msra.mxu0 %v633
      %652 = vmatprep.subr.bf16.mxu0 0
      %653 = vmatpush1.bf16.msra.mxu0 %v634
      %654 = vmatprep.subr.bf16.mxu0 0
      %655 = vmatpush1.bf16.msra.mxu0 %v635
      %656 = vmatprep.subr.bf16.mxu0 0
      %657 = vmatpush1.bf16.msra.mxu0 %v636
      %658 = vmatprep.subr.bf16.mxu0 0
      %659 = vmatpush1.bf16.msra.mxu0 %v637
      %660 = vmatprep.subr.bf16.mxu0 0
      %661 = vmatpush1.bf16.msra.mxu0 %v638
      %662 = vmatprep.subr.bf16.mxu0 0
      %663 = vmatpush1.bf16.msra.mxu0 %v639
      %664 = vmatprep.subr.bf16.mxu0 0
      %665 = vmatpush1.bf16.msra.mxu0 0
      %666 = vmatprep.subr.bf16.mxu0 0
      %667 = vmatpush1.bf16.msra.mxu0 0
      %668 = vmatprep.subr.bf16.mxu0 0
      %669 = vmatpush1.bf16.msra.mxu0 0
      %670 = vmatprep.subr.bf16.mxu0 0
      %671 = vmatpush1.bf16.msra.mxu0 0
      %672 = vmatprep.subr.bf16.mxu0 0
      %673 = vmatpush1.bf16.msra.mxu0 0
      %674 = vmatprep.subr.bf16.mxu0 0
      %675 = vmatpush1.bf16.msra.mxu0 0
      %676 = vmatprep.subr.bf16.mxu0 0
      %677 = vmatpush1.bf16.msra.mxu0 0
      %678 = vmatprep.subr.bf16.mxu0 0
      %679 = vmatpush1.bf16.msra.mxu0 0
      %680 = vmatprep.mubr.bf16.mxu0 0
      %681 = vmatmul.mubr.bf16.gmra.mrb[0].mxu0 %v586
      %v682 = vpop.f32.mrb[0].mxu0
      %v683 = vadd.f32 %v598, %v682
      %v684 = vpop.f32.mrb[0].mxu0
      %v685 = vpop.f32.mrb[0].mxu0
      %v686 = vadd.f32 %v598, %v685
      %v687 = vpop.f32.mrb[0].mxu0
      %688 = vmatprep.mubr.bf16.mxu0 0
      %689 = vmatmul.mubr.bf16.gmra.mrb[0].mxu0 %v587
      %v690 = vpop.f32.mrb[0].mxu0
      %v691 = vadd.f32 %v598, %v690
      %v692 = vpop.f32.mrb[0].mxu0
      %v693 = vpop.f32.mrb[0].mxu0
      %v694 = vadd.f32 %v598, %v693
      %v695 = vpop.f32.mrb[0].mxu0
      %696 = vmatprep.mubr.bf16.mxu0 0
      %697 = vmatmul.mubr.bf16.gmra.mrb[0].mxu0 %v588
      %v698 = vpop.f32.mrb[0].mxu0
      %v699 = vadd.f32 %v598, %v698
      %v700 = vpop.f32.mrb[0].mxu0
      %v701 = vpop.f32.mrb[0].mxu0
      %v702 = vadd.f32 %v598, %v701
      %v703 = vpop.f32.mrb[0].mxu0
      %704 = vmatprep.mubr.bf16.mxu0 0
      %705 = vmatmul.mubr.bf16.gmra.mrb[0].mxu0 %v589
      %v706 = vpop.f32.mrb[0].mxu0
      %v707 = vadd.f32 %v598, %v706
      %v708 = vpop.f32.mrb[0].mxu0
      %v709 = vpop.f32.mrb[0].mxu0
      %v710 = vadd.f32 %v598, %v709
      %v711 = vpop.f32.mrb[0].mxu0
      %712 = vmatprep.mubr.bf16.mxu0 0
      %713 = vmatmul.mubr.bf16.gmra.mrb[0].mxu0 %v590
      %v714 = vpop.f32.mrb[0].mxu0
      %v715 = vadd.f32 %v598, %v714
      %v716 = vpop.f32.mrb[0].mxu0
      %v717 = vpop.f32.mrb[0].mxu0
      %v718 = vadd.f32 %v598, %v717
      %v719 = vpop.f32.mrb[0].mxu0
      %720 = vmatprep.mubr.bf16.mxu0 0
      %721 = vmatmul.mubr.bf16.gmra.mrb[0].mxu0 %v591
      %v722 = vpop.f32.mrb[0].mxu0
      %v723 = vadd.f32 %v598, %v722
      %v724 = vpop.f32.mrb[0].mxu0
      %v725 = vpop.f32.mrb[0].mxu0
      %v726 = vadd.f32 %v598, %v725
      %v727 = vpop.f32.mrb[0].mxu0
      %728 = vmatprep.mubr.bf16.mxu0 0
      %729 = vmatmul.mubr.bf16.gmra.mrb[0].mxu0 %v592
      %v730 = vpop.f32.mrb[0].mxu0
      %v731 = vadd.f32 %v598, %v730
      %v732 = vpop.f32.mrb[0].mxu0
      %v733 = vpop.f32.mrb[0].mxu0
      %v734 = vadd.f32 %v598, %v733
      %v735 = vpop.f32.mrb[0].mxu0
      %736 = vmatprep.mubr.bf16.mxu0 0
      %737 = vmatmul.mubr.bf16.gmra.mrb[0].mxu0 %v593
      %v738 = vpop.f32.mrb[0].mxu0
      %v739 = vadd.f32 %v598, %v738
      %v740 = vpop.f32.mrb[0].mxu0
      %v741 = vpop.f32.mrb[0].mxu0
      %v742 = vadd.f32 %v598, %v741
      %v743 = vpop.f32.mrb[0].mxu0
      %744 = vdwg.mxu0
      %v745 = vmax.f32 %v683, 0.0
      %v746 = vmax.f32 %v686, 0.0
      %v747 = vmax.f32 %v691, 0.0
      %v748 = vmax.f32 %v694, 0.0
      %v749 = vmax.f32 %v699, 0.0
      %v750 = vmax.f32 %v702, 0.0
      %v751 = vmax.f32 %v707, 0.0
      %v752 = vmax.f32 %v710, 0.0
      %v753 = vmax.f32 %v715, 0.0
      %v754 = vmax.f32 %v718, 0.0
      %v755 = vmax.f32 %v723, 0.0
      %v756 = vmax.f32 %v726, 0.0
      %v757 = vmax.f32 %v731, 0.0
      %v758 = vmax.f32 %v734, 0.0
      %v759 = vmax.f32 %v739, 0.0
      %v760 = vmax.f32 %v742, 0.0
      %v761 = vld [vmem:[%s3] sm:$0xf]
      %v762 = vld [vmem:[%s3 + $0x4] sm:$0xf]
      %v763 = vld [vmem:[%s3 + $0x8] sm:$0xf]
      %v764 = vld [vmem:[%s3 + $0xc] sm:$0xf]
      %v765 = vld [vmem:[%s3 + $0x10] sm:$0xf]
      %v766 = vld [vmem:[%s3 + $0x14] sm:$0xf]
      %v767 = vld [vmem:[%s3 + $0x18] sm:$0xf]
      %v768 = vld [vmem:[%s3 + $0x1c] sm:$0xf]
      %v769 = vld [vmem:[%s3 + $0x20] sm:$0xf]
      %v770 = vld [vmem:[%s3 + $0x24] sm:$0xf]
      %v771 = vld [vmem:[%s3 + $0x28] sm:$0xf]
      %v772 = vld [vmem:[%s3 + $0x2c] sm:$0xf]
      %v773 = vld [vmem:[%s3 + $0x30] sm:$0xf]
      %v774 = vld [vmem:[%s3 + $0x34] sm:$0xf]
      %v775 = vld [vmem:[%s3 + $0x38] sm:$0xf]
      %v776 = vld [vmem:[%s3 + $0x3c] sm:$0xf]
      %v777 = vld [vmem:[%s4] sm:$0x1]
      %v778 = vpack.c.bf16 %v746, %v745
      %v779 = vpack.c.bf16 %v748, %v747
      %v780 = vpack.c.bf16 %v750, %v749
      %v781 = vpack.c.bf16 %v752, %v751
      %v782 = vpack.c.bf16 %v754, %v753
      %v783 = vpack.c.bf16 %v756, %v755
      %v784 = vpack.c.bf16 %v758, %v757
      %v785 = vpack.c.bf16 %v760, %v759
      %v787 = vlaneseq
      %v788 = vshrl.u32 %v787, 7
      %v789 = vsub.s32 0, %v788
      %v790 = vrot.slane %v777, %v789
      %v808 = vunpack.c.l.b16 %v761
      %v809 = vunpack.c.l.b16 %v762
      %v810 = vunpack.c.l.b16 %v763
      %v811 = vunpack.c.l.b16 %v764
      %v812 = vunpack.c.l.b16 %v765
      %v813 = vunpack.c.l.b16 %v766
      %v814 = vunpack.c.l.b16 %v767
      %v815 = vunpack.c.l.b16 %v768
      %v816 = vunpack.c.l.b16 %v769
      %v817 = vunpack.c.l.b16 %v770
      %v818 = vunpack.c.l.b16 %v771
      %v819 = vunpack.c.l.b16 %v772
      %v820 = vunpack.c.l.b16 %v773
      %v821 = vunpack.c.l.b16 %v774
      %v822 = vunpack.c.l.b16 %v775
      %v823 = vunpack.c.l.b16 %v776
      %v824 = vpack.c.b16 %v809, %v808
      %v825 = vpack.c.b16 %v811, %v810
      %v826 = vpack.c.b16 %v813, %v812
      %v827 = vpack.c.b16 %v815, %v814
      %v828 = vpack.c.b16 %v817, %v816
      %v829 = vpack.c.b16 %v819, %v818
      %v830 = vpack.c.b16 %v821, %v820
      %v831 = vpack.c.b16 %v823, %v822
      %840 = vmatprep.subr.bf16.mxu0 0
      %841 = vmatpush1.bf16.msra.mxu0 %v824
      %842 = vmatprep.subr.bf16.mxu0 0
      %843 = vmatpush1.bf16.msra.mxu0 %v825
      %844 = vmatprep.subr.bf16.mxu0 0
      %845 = vmatpush1.bf16.msra.mxu0 %v826
      %846 = vmatprep.subr.bf16.mxu0 0
      %847 = vmatpush1.bf16.msra.mxu0 %v827
      %848 = vmatprep.subr.bf16.mxu0 0
      %849 = vmatpush1.bf16.msra.mxu0 %v828
      %850 = vmatprep.subr.bf16.mxu0 0
      %851 = vmatpush1.bf16.msra.mxu0 %v829
      %852 = vmatprep.subr.bf16.mxu0 0
      %853 = vmatpush1.bf16.msra.mxu0 %v830
      %854 = vmatprep.subr.bf16.mxu0 0
      %855 = vmatpush1.bf16.msra.mxu0 %v831
      %856 = vmatprep.subr.bf16.mxu0 0
      %857 = vmatpush1.bf16.msra.mxu0 0
      %858 = vmatprep.subr.bf16.mxu0 0
      %859 = vmatpush1.bf16.msra.mxu0 0
      %860 = vmatprep.subr.bf16.mxu0 0
      %861 = vmatpush1.bf16.msra.mxu0 0
      %862 = vmatprep.subr.bf16.mxu0 0
      %863 = vmatpush1.bf16.msra.mxu0 0
      %864 = vmatprep.subr.bf16.mxu0 0
      %865 = vmatpush1.bf16.msra.mxu0 0
      %866 = vmatprep.subr.bf16.mxu0 0
      %867 = vmatpush1.bf16.msra.mxu0 0
      %868 = vmatprep.subr.bf16.mxu0 0
      %869 = vmatpush1.bf16.msra.mxu0 0
      %870 = vmatprep.subr.bf16.mxu0 0
      %871 = vmatpush1.bf16.msra.mxu0 0
      %872 = vmatprep.mubr.bf16.mxu0 0
      %873 = vmatmul.mubr.bf16.gmra.mrb[0].mxu0 %v778
      %v874 = vpop.f32.mrb[0].mxu0
      %v875 = vadd.f32 %v790, %v874
      %v876 = vpop.f32.mrb[0].mxu0
      %v877 = vpop.f32.mrb[0].mxu0
      %v878 = vadd.f32 %v790, %v877
      %v879 = vpop.f32.mrb[0].mxu0
      %880 = vmatprep.mubr.bf16.mxu0 0
      %881 = vmatmul.mubr.bf16.gmra.mrb[0].mxu0 %v779
      %v882 = vpop.f32.mrb[0].mxu0
      %v883 = vadd.f32 %v790, %v882
      %v884 = vpop.f32.mrb[0].mxu0
      %v885 = vpop.f32.mrb[0].mxu0
      %v886 = vadd.f32 %v790, %v885
      %v887 = vpop.f32.mrb[0].mxu0
      %888 = vmatprep.mubr.bf16.mxu0 0
      %889 = vmatmul.mubr.bf16.gmra.mrb[0].mxu0 %v780
      %v890 = vpop.f32.mrb[0].mxu0
      %v891 = vadd.f32 %v790, %v890
      %v892 = vpop.f32.mrb[0].mxu0
      %v893 = vpop.f32.mrb[0].mxu0
      %v894 = vadd.f32 %v790, %v893
      %v895 = vpop.f32.mrb[0].mxu0
      %896 = vmatprep.mubr.bf16.mxu0 0
      %897 = vmatmul.mubr.bf16.gmra.mrb[0].mxu0 %v781
      %v898 = vpop.f32.mrb[0].mxu0
      %v899 = vadd.f32 %v790, %v898
      %v900 = vpop.f32.mrb[0].mxu0
      %v901 = vpop.f32.mrb[0].mxu0
      %v902 = vadd.f32 %v790, %v901
      %v903 = vpop.f32.mrb[0].mxu0
      %904 = vmatprep.mubr.bf16.mxu0 0
      %905 = vmatmul.mubr.bf16.gmra.mrb[0].mxu0 %v782
      %v906 = vpop.f32.mrb[0].mxu0
      %v907 = vadd.f32 %v790, %v906
      %v908 = vpop.f32.mrb[0].mxu0
      %v909 = vpop.f32.mrb[0].mxu0
      %v910 = vadd.f32 %v790, %v909
      %v911 = vpop.f32.mrb[0].mxu0
      %912 = vmatprep.mubr.bf16.mxu0 0
      %913 = vmatmul.mubr.bf16.gmra.mrb[0].mxu0 %v783
      %v914 = vpop.f32.mrb[0].mxu0
      %v915 = vadd.f32 %v790, %v914
      %v916 = vpop.f32.mrb[0].mxu0
      %v917 = vpop.f32.mrb[0].mxu0
      %v918 = vadd.f32 %v790, %v917
      %v919 = vpop.f32.mrb[0].mxu0
      %920 = vmatprep.mubr.bf16.mxu0 0
      %921 = vmatmul.mubr.bf16.gmra.mrb[0].mxu0 %v784
      %v922 = vpop.f32.mrb[0].mxu0
      %v923 = vadd.f32 %v790, %v922
      %v924 = vpop.f32.mrb[0].mxu0
      %v925 = vpop.f32.mrb[0].mxu0
      %v926 = vadd.f32 %v790, %v925
      %v927 = vpop.f32.mrb[0].mxu0
      %928 = vmatprep.mubr.bf16.mxu0 0
      %929 = vmatmul.mubr.bf16.gmra.mrb[0].mxu0 %v785
      %v930 = vpop.f32.mrb[0].mxu0
      %v931 = vadd.f32 %v790, %v930
      %v932 = vpop.f32.mrb[0].mxu0
      %v933 = vpop.f32.mrb[0].mxu0
      %v934 = vadd.f32 %v790, %v933
      %v935 = vpop.f32.mrb[0].mxu0
      %936 = vdwg.mxu0
      %v937 = vmax.f32 %v875, 0.0
      %v938 = vmax.f32 %v878, 0.0
      %v939 = vmax.f32 %v883, 0.0
      %v940 = vmax.f32 %v886, 0.0
      %v941 = vmax.f32 %v891, 0.0
      %v942 = vmax.f32 %v894, 0.0
      %v943 = vmax.f32 %v899, 0.0
      %v944 = vmax.f32 %v902, 0.0
      %v945 = vmax.f32 %v907, 0.0
      %v946 = vmax.f32 %v910, 0.0
      %v947 = vmax.f32 %v915, 0.0
      %v948 = vmax.f32 %v918, 0.0
      %v949 = vmax.f32 %v923, 0.0
      %v950 = vmax.f32 %v926, 0.0
      %v951 = vmax.f32 %v931, 0.0
      %v952 = vmax.f32 %v934, 0.0
      %v953 = vld [vmem:[%s5] sm:$0xf]
      %v954 = vld [vmem:[%s5 + $0x4] sm:$0xf]
      %v955 = vld [vmem:[%s5 + $0x8] sm:$0xf]
      %v956 = vld [vmem:[%s5 + $0xc] sm:$0xf]
      %v957 = vld [vmem:[%s5 + $0x10] sm:$0xf]
      %v958 = vld [vmem:[%s5 + $0x14] sm:$0xf]
      %v959 = vld [vmem:[%s5 + $0x18] sm:$0xf]
      %v960 = vld [vmem:[%s5 + $0x1c] sm:$0xf]
      %v961 = vld [vmem:[%s5 + $0x20] sm:$0xf]
      %v962 = vld [vmem:[%s5 + $0x24] sm:$0xf]
      %v963 = vld [vmem:[%s5 + $0x28] sm:$0xf]
      %v964 = vld [vmem:[%s5 + $0x2c] sm:$0xf]
      %v965 = vld [vmem:[%s5 + $0x30] sm:$0xf]
      %v966 = vld [vmem:[%s5 + $0x34] sm:$0xf]
      %v967 = vld [vmem:[%s5 + $0x38] sm:$0xf]
      %v968 = vld [vmem:[%s5 + $0x3c] sm:$0xf]
      %v969 = vld [vmem:[%s6] sm:$0x1]
      %v970 = vpack.c.bf16 %v938, %v937
      %v971 = vpack.c.bf16 %v940, %v939
      %v972 = vpack.c.bf16 %v942, %v941
      %v973 = vpack.c.bf16 %v944, %v943
      %v974 = vpack.c.bf16 %v946, %v945
      %v975 = vpack.c.bf16 %v948, %v947
      %v976 = vpack.c.bf16 %v950, %v949
      %v977 = vpack.c.bf16 %v952, %v951
      %v979 = vlaneseq
      %v980 = vshrl.u32 %v979, 7
      %v981 = vsub.s32 0, %v980
      %v982 = vrot.slane %v969, %v981
      %v1000 = vunpack.c.l.b16 %v953
      %v1001 = vunpack.c.l.b16 %v954
      %v1002 = vunpack.c.l.b16 %v955
      %v1003 = vunpack.c.l.b16 %v956
      %v1004 = vunpack.c.l.b16 %v957
      %v1005 = vunpack.c.l.b16 %v958
      %v1006 = vunpack.c.l.b16 %v959
      %v1007 = vunpack.c.l.b16 %v960
      %v1008 = vunpack.c.l.b16 %v961
      %v1009 = vunpack.c.l.b16 %v962
      %v1010 = vunpack.c.l.b16 %v963
      %v1011 = vunpack.c.l.b16 %v964
      %v1012 = vunpack.c.l.b16 %v965
      %v1013 = vunpack.c.l.b16 %v966
      %v1014 = vunpack.c.l.b16 %v967
      %v1015 = vunpack.c.l.b16 %v968
      %v1016 = vpack.c.b16 %v1001, %v1000
      %v1017 = vpack.c.b16 %v1003, %v1002
      %v1018 = vpack.c.b16 %v1005, %v1004
      %v1019 = vpack.c.b16 %v1007, %v1006
      %v1020 = vpack.c.b16 %v1009, %v1008
      %v1021 = vpack.c.b16 %v1011, %v1010
      %v1022 = vpack.c.b16 %v1013, %v1012
      %v1023 = vpack.c.b16 %v1015, %v1014
      %1032 = vmatprep.subr.bf16.mxu0 0
      %1033 = vmatpush1.bf16.msra.mxu0 %v1016
      %1034 = vmatprep.subr.bf16.mxu0 0
      %1035 = vmatpush1.bf16.msra.mxu0 %v1017
      %1036 = vmatprep.subr.bf16.mxu0 0
      %1037 = vmatpush1.bf16.msra.mxu0 %v1018
      %1038 = vmatprep.subr.bf16.mxu0 0
      %1039 = vmatpush1.bf16.msra.mxu0 %v1019
      %1040 = vmatprep.subr.bf16.mxu0 0
      %1041 = vmatpush1.bf16.msra.mxu0 %v1020
      %1042 = vmatprep.subr.bf16.mxu0 0
      %1043 = vmatpush1.bf16.msra.mxu0 %v1021
      %1044 = vmatprep.subr.bf16.mxu0 0
      %1045 = vmatpush1.bf16.msra.mxu0 %v1022
      %1046 = vmatprep.subr.bf16.mxu0 0
      %1047 = vmatpush1.bf16.msra.mxu0 %v1023
      %1048 = vmatprep.subr.bf16.mxu0 0
      %1049 = vmatpush1.bf16.msra.mxu0 0
      %1050 = vmatprep.subr.bf16.mxu0 0
      %1051 = vmatpush1.bf16.msra.mxu0 0
      %1052 = vmatprep.subr.bf16.mxu0 0
      %1053 = vmatpush1.bf16.msra.mxu0 0
      %1054 = vmatprep.subr.bf16.mxu0 0
      %1055 = vmatpush1.bf16.msra.mxu0 0
      %1056 = vmatprep.subr.bf16.mxu0 0
      %1057 = vmatpush1.bf16.msra.mxu0 0
      %1058 = vmatprep.subr.bf16.mxu0 0
      %1059 = vmatpush1.bf16.msra.mxu0 0
      %1060 = vmatprep.subr.bf16.mxu0 0
      %1061 = vmatpush1.bf16.msra.mxu0 0
      %1062 = vmatprep.subr.bf16.mxu0 0
      %1063 = vmatpush1.bf16.msra.mxu0 0
      %1064 = vmatprep.mubr.bf16.mxu0 0
      %1065 = vmatmul.mubr.bf16.gmra.mrb[0].mxu0 %v970
      %v1066 = vpop.f32.mrb[0].mxu0
      %v1067 = vadd.f32 %v982, %v1066
      %v1068 = vpop.f32.mrb[0].mxu0
      %v1069 = vpop.f32.mrb[0].mxu0
      %v1070 = vadd.f32 %v982, %v1069
      %v1071 = vpop.f32.mrb[0].mxu0
      %1072 = vmatprep.mubr.bf16.mxu0 0
      %1073 = vmatmul.mubr.bf16.gmra.mrb[0].mxu0 %v971
      %v1074 = vpop.f32.mrb[0].mxu0
      %v1075 = vadd.f32 %v982, %v1074
      %v1076 = vpop.f32.mrb[0].mxu0
      %v1077 = vpop.f32.mrb[0].mxu0
      %v1078 = vadd.f32 %v982, %v1077
      %v1079 = vpop.f32.mrb[0].mxu0
      %1080 = vmatprep.mubr.bf16.mxu0 0
      %1081 = vmatmul.mubr.bf16.gmra.mrb[0].mxu0 %v972
      %v1082 = vpop.f32.mrb[0].mxu0
      %v1083 = vadd.f32 %v982, %v1082
      %v1084 = vpop.f32.mrb[0].mxu0
      %v1085 = vpop.f32.mrb[0].mxu0
      %v1086 = vadd.f32 %v982, %v1085
      %v1087 = vpop.f32.mrb[0].mxu0
      %1088 = vmatprep.mubr.bf16.mxu0 0
      %1089 = vmatmul.mubr.bf16.gmra.mrb[0].mxu0 %v973
      %v1090 = vpop.f32.mrb[0].mxu0
      %v1091 = vadd.f32 %v982, %v1090
      %v1092 = vpop.f32.mrb[0].mxu0
      %v1093 = vpop.f32.mrb[0].mxu0
      %v1094 = vadd.f32 %v982, %v1093
      %v1095 = vpop.f32.mrb[0].mxu0
      %1096 = vmatprep.mubr.bf16.mxu0 0
      %1097 = vmatmul.mubr.bf16.gmra.mrb[0].mxu0 %v974
      %v1098 = vpop.f32.mrb[0].mxu0
      %v1099 = vadd.f32 %v982, %v1098
      %v1100 = vpop.f32.mrb[0].mxu0
      %v1101 = vpop.f32.mrb[0].mxu0
      %v1102 = vadd.f32 %v982, %v1101
      %v1103 = vpop.f32.mrb[0].mxu0
      %1104 = vmatprep.mubr.bf16.mxu0 0
      %1105 = vmatmul.mubr.bf16.gmra.mrb[0].mxu0 %v975
      %v1106 = vpop.f32.mrb[0].mxu0
      %v1107 = vadd.f32 %v982, %v1106
      %v1108 = vpop.f32.mrb[0].mxu0
      %v1109 = vpop.f32.mrb[0].mxu0
      %v1110 = vadd.f32 %v982, %v1109
      %v1111 = vpop.f32.mrb[0].mxu0
      %1112 = vmatprep.mubr.bf16.mxu0 0
      %1113 = vmatmul.mubr.bf16.gmra.mrb[0].mxu0 %v976
      %v1114 = vpop.f32.mrb[0].mxu0
      %v1115 = vadd.f32 %v982, %v1114
      %v1116 = vpop.f32.mrb[0].mxu0
      %v1117 = vpop.f32.mrb[0].mxu0
      %v1118 = vadd.f32 %v982, %v1117
      %v1119 = vpop.f32.mrb[0].mxu0
      %1120 = vmatprep.mubr.bf16.mxu0 0
      %1121 = vmatmul.mubr.bf16.gmra.mrb[0].mxu0 %v977
      %v1122 = vpop.f32.mrb[0].mxu0
      %v1123 = vadd.f32 %v982, %v1122
      %v1124 = vpop.f32.mrb[0].mxu0
      %v1125 = vpop.f32.mrb[0].mxu0
      %v1126 = vadd.f32 %v982, %v1125
      %v1127 = vpop.f32.mrb[0].mxu0
      %1128 = vdwg.mxu0
      %v1129 = vadd.f32 %v1067, %v745
      %v1130 = vadd.f32 %v1070, %v746
      %v1131 = vadd.f32 %v1075, %v747
      %v1132 = vadd.f32 %v1078, %v748
      %v1133 = vadd.f32 %v1083, %v749
      %v1134 = vadd.f32 %v1086, %v750
      %v1135 = vadd.f32 %v1091, %v751
      %v1136 = vadd.f32 %v1094, %v752
      %v1137 = vadd.f32 %v1099, %v753
      %v1138 = vadd.f32 %v1102, %v754
      %v1139 = vadd.f32 %v1107, %v755
      %v1140 = vadd.f32 %v1110, %v756
      %v1141 = vadd.f32 %v1115, %v757
      %v1142 = vadd.f32 %v1118, %v758
      %v1143 = vadd.f32 %v1123, %v759
      %v1144 = vadd.f32 %v1126, %v760
      %v1145 = vmax.f32 %v1129, 0.0
      %v1146 = vmax.f32 %v1130, 0.0
      %v1147 = vmax.f32 %v1131, 0.0
      %v1148 = vmax.f32 %v1132, 0.0
      %v1149 = vmax.f32 %v1133, 0.0
      %v1150 = vmax.f32 %v1134, 0.0
      %v1151 = vmax.f32 %v1135, 0.0
      %v1152 = vmax.f32 %v1136, 0.0
      %v1153 = vmax.f32 %v1137, 0.0
      %v1154 = vmax.f32 %v1138, 0.0
      %v1155 = vmax.f32 %v1139, 0.0
      %v1156 = vmax.f32 %v1140, 0.0
      %v1157 = vmax.f32 %v1141, 0.0
      %v1158 = vmax.f32 %v1142, 0.0
      %v1159 = vmax.f32 %v1143, 0.0
      %v1160 = vmax.f32 %v1144, 0.0
      %s1161 = scalar_lea.vmem %s3, 64
      %v1162 = vld [vmem:[%s1161] sm:$0xf]
      %v1163 = vld [vmem:[%s1161 + $0x4] sm:$0xf]
      %v1164 = vld [vmem:[%s1161 + $0x8] sm:$0xf]
      %v1165 = vld [vmem:[%s1161 + $0xc] sm:$0xf]
      %v1166 = vld [vmem:[%s1161 + $0x10] sm:$0xf]
      %v1167 = vld [vmem:[%s1161 + $0x14] sm:$0xf]
      %v1168 = vld [vmem:[%s1161 + $0x18] sm:$0xf]
      %v1169 = vld [vmem:[%s1161 + $0x1c] sm:$0xf]
      %v1170 = vld [vmem:[%s1161 + $0x20] sm:$0xf]
      %v1171 = vld [vmem:[%s1161 + $0x24] sm:$0xf]
      %v1172 = vld [vmem:[%s1161 + $0x28] sm:$0xf]
      %v1173 = vld [vmem:[%s1161 + $0x2c] sm:$0xf]
      %v1174 = vld [vmem:[%s1161 + $0x30] sm:$0xf]
      %v1175 = vld [vmem:[%s1161 + $0x34] sm:$0xf]
      %v1176 = vld [vmem:[%s1161 + $0x38] sm:$0xf]
      %v1177 = vld [vmem:[%s1161 + $0x3c] sm:$0xf]
      %s1178 = scalar_lea.vmem %s4, 1
      %v1179 = vld [vmem:[%s1178] sm:$0x1]
      %v1180 = vpack.c.bf16 %v1146, %v1145
      %v1181 = vpack.c.bf16 %v1148, %v1147
      %v1182 = vpack.c.bf16 %v1150, %v1149
      %v1183 = vpack.c.bf16 %v1152, %v1151
      %v1184 = vpack.c.bf16 %v1154, %v1153
      %v1185 = vpack.c.bf16 %v1156, %v1155
      %v1186 = vpack.c.bf16 %v1158, %v1157
      %v1187 = vpack.c.bf16 %v1160, %v1159
      %v1189 = vlaneseq
      %v1190 = vshrl.u32 %v1189, 7
      %v1191 = vsub.s32 0, %v1190
      %v1192 = vrot.slane %v1179, %v1191
      %v1210 = vunpack.c.l.b16 %v1162
      %v1211 = vunpack.c.l.b16 %v1163
      %v1212 = vunpack.c.l.b16 %v1164
      %v1213 = vunpack.c.l.b16 %v1165
      %v1214 = vunpack.c.l.b16 %v1166
      %v1215 = vunpack.c.l.b16 %v1167
      %v1216 = vunpack.c.l.b16 %v1168
      %v1217 = vunpack.c.l.b16 %v1169
      %v1218 = vunpack.c.l.b16 %v1170
      %v1219 = vunpack.c.l.b16 %v1171
      %v1220 = vunpack.c.l.b16 %v1172
      %v1221 = vunpack.c.l.b16 %v1173
      %v1222 = vunpack.c.l.b16 %v1174
      %v1223 = vunpack.c.l.b16 %v1175
      %v1224 = vunpack.c.l.b16 %v1176
      %v1225 = vunpack.c.l.b16 %v1177
      %v1226 = vpack.c.b16 %v1211, %v1210
      %v1227 = vpack.c.b16 %v1213, %v1212
      %v1228 = vpack.c.b16 %v1215, %v1214
      %v1229 = vpack.c.b16 %v1217, %v1216
      %v1230 = vpack.c.b16 %v1219, %v1218
      %v1231 = vpack.c.b16 %v1221, %v1220
      %v1232 = vpack.c.b16 %v1223, %v1222
      %v1233 = vpack.c.b16 %v1225, %v1224
      %1242 = vmatprep.subr.bf16.mxu0 0
      %1243 = vmatpush1.bf16.msra.mxu0 %v1226
      %1244 = vmatprep.subr.bf16.mxu0 0
      %1245 = vmatpush1.bf16.msra.mxu0 %v1227
      %1246 = vmatprep.subr.bf16.mxu0 0
      %1247 = vmatpush1.bf16.msra.mxu0 %v1228
      %1248 = vmatprep.subr.bf16.mxu0 0
      %1249 = vmatpush1.bf16.msra.mxu0 %v1229
      %1250 = vmatprep.subr.bf16.mxu0 0
      %1251 = vmatpush1.bf16.msra.mxu0 %v1230
      %1252 = vmatprep.subr.bf16.mxu0 0
      %1253 = vmatpush1.bf16.msra.mxu0 %v1231
      %1254 = vmatprep.subr.bf16.mxu0 0
      %1255 = vmatpush1.bf16.msra.mxu0 %v1232
      %1256 = vmatprep.subr.bf16.mxu0 0
      %1257 = vmatpush1.bf16.msra.mxu0 %v1233
      %1258 = vmatprep.subr.bf16.mxu0 0
      %1259 = vmatpush1.bf16.msra.mxu0 0
      %1260 = vmatprep.subr.bf16.mxu0 0
      %1261 = vmatpush1.bf16.msra.mxu0 0
      %1262 = vmatprep.subr.bf16.mxu0 0
      %1263 = vmatpush1.bf16.msra.mxu0 0
      %1264 = vmatprep.subr.bf16.mxu0 0
      %1265 = vmatpush1.bf16.msra.mxu0 0
      %1266 = vmatprep.subr.bf16.mxu0 0
      %1267 = vmatpush1.bf16.msra.mxu0 0
      %1268 = vmatprep.subr.bf16.mxu0 0
      %1269 = vmatpush1.bf16.msra.mxu0 0
      %1270 = vmatprep.subr.bf16.mxu0 0
      %1271 = vmatpush1.bf16.msra.mxu0 0
      %1272 = vmatprep.subr.bf16.mxu0 0
      %1273 = vmatpush1.bf16.msra.mxu0 0
      %1274 = vmatprep.mubr.bf16.mxu0 0
      %1275 = vmatmul.mubr.bf16.gmra.mrb[0].mxu0 %v1180
      %v1276 = vpop.f32.mrb[0].mxu0
      %v1277 = vadd.f32 %v1192, %v1276
      %v1278 = vpop.f32.mrb[0].mxu0
      %v1279 = vpop.f32.mrb[0].mxu0
      %v1280 = vadd.f32 %v1192, %v1279
      %v1281 = vpop.f32.mrb[0].mxu0
      %1282 = vmatprep.mubr.bf16.mxu0 0
      %1283 = vmatmul.mubr.bf16.gmra.mrb[0].mxu0 %v1181
      %v1284 = vpop.f32.mrb[0].mxu0
      %v1285 = vadd.f32 %v1192, %v1284
      %v1286 = vpop.f32.mrb[0].mxu0
      %v1287 = vpop.f32.mrb[0].mxu0
      %v1288 = vadd.f32 %v1192, %v1287
      %v1289 = vpop.f32.mrb[0].mxu0
      %1290 = vmatprep.mubr.bf16.mxu0 0
      %1291 = vmatmul.mubr.bf16.gmra.mrb[0].mxu0 %v1182
      %v1292 = vpop.f32.mrb[0].mxu0
      %v1293 = vadd.f32 %v1192, %v1292
      %v1294 = vpop.f32.mrb[0].mxu0
      %v1295 = vpop.f32.mrb[0].mxu0
      %v1296 = vadd.f32 %v1192, %v1295
      %v1297 = vpop.f32.mrb[0].mxu0
      %1298 = vmatprep.mubr.bf16.mxu0 0
      %1299 = vmatmul.mubr.bf16.gmra.mrb[0].mxu0 %v1183
      %v1300 = vpop.f32.mrb[0].mxu0
      %v1301 = vadd.f32 %v1192, %v1300
      %v1302 = vpop.f32.mrb[0].mxu0
      %v1303 = vpop.f32.mrb[0].mxu0
      %v1304 = vadd.f32 %v1192, %v1303
      %v1305 = vpop.f32.mrb[0].mxu0
      %1306 = vmatprep.mubr.bf16.mxu0 0
      %1307 = vmatmul.mubr.bf16.gmra.mrb[0].mxu0 %v1184
      %v1308 = vpop.f32.mrb[0].mxu0
      %v1309 = vadd.f32 %v1192, %v1308
      %v1310 = vpop.f32.mrb[0].mxu0
      %v1311 = vpop.f32.mrb[0].mxu0
      %v1312 = vadd.f32 %v1192, %v1311
      %v1313 = vpop.f32.mrb[0].mxu0
      %1314 = vmatprep.mubr.bf16.mxu0 0
      %1315 = vmatmul.mubr.bf16.gmra.mrb[0].mxu0 %v1185
      %v1316 = vpop.f32.mrb[0].mxu0
      %v1317 = vadd.f32 %v1192, %v1316
      %v1318 = vpop.f32.mrb[0].mxu0
      %v1319 = vpop.f32.mrb[0].mxu0
      %v1320 = vadd.f32 %v1192, %v1319
      %v1321 = vpop.f32.mrb[0].mxu0
      %1322 = vmatprep.mubr.bf16.mxu0 0
      %1323 = vmatmul.mubr.bf16.gmra.mrb[0].mxu0 %v1186
      %v1324 = vpop.f32.mrb[0].mxu0
      %v1325 = vadd.f32 %v1192, %v1324
      %v1326 = vpop.f32.mrb[0].mxu0
      %v1327 = vpop.f32.mrb[0].mxu0
      %v1328 = vadd.f32 %v1192, %v1327
      %v1329 = vpop.f32.mrb[0].mxu0
      %1330 = vmatprep.mubr.bf16.mxu0 0
      %1331 = vmatmul.mubr.bf16.gmra.mrb[0].mxu0 %v1187
      %v1332 = vpop.f32.mrb[0].mxu0
      %v1333 = vadd.f32 %v1192, %v1332
      %v1334 = vpop.f32.mrb[0].mxu0
      %v1335 = vpop.f32.mrb[0].mxu0
      %v1336 = vadd.f32 %v1192, %v1335
      %v1337 = vpop.f32.mrb[0].mxu0
      %1338 = vdwg.mxu0
      %v1339 = vmax.f32 %v1277, 0.0
      %v1340 = vmax.f32 %v1280, 0.0
      %v1341 = vmax.f32 %v1285, 0.0
      %v1342 = vmax.f32 %v1288, 0.0
      %v1343 = vmax.f32 %v1293, 0.0
      %v1344 = vmax.f32 %v1296, 0.0
      %v1345 = vmax.f32 %v1301, 0.0
      %v1346 = vmax.f32 %v1304, 0.0
      %v1347 = vmax.f32 %v1309, 0.0
      %v1348 = vmax.f32 %v1312, 0.0
      %v1349 = vmax.f32 %v1317, 0.0
      %v1350 = vmax.f32 %v1320, 0.0
      %v1351 = vmax.f32 %v1325, 0.0
      %v1352 = vmax.f32 %v1328, 0.0
      %v1353 = vmax.f32 %v1333, 0.0
      %v1354 = vmax.f32 %v1336, 0.0
      %s1355 = scalar_lea.vmem %s5, 64
      %v1356 = vld [vmem:[%s1355] sm:$0xf]
      %v1357 = vld [vmem:[%s1355 + $0x4] sm:$0xf]
      %v1358 = vld [vmem:[%s1355 + $0x8] sm:$0xf]
      %v1359 = vld [vmem:[%s1355 + $0xc] sm:$0xf]
      %v1360 = vld [vmem:[%s1355 + $0x10] sm:$0xf]
      %v1361 = vld [vmem:[%s1355 + $0x14] sm:$0xf]
      %v1362 = vld [vmem:[%s1355 + $0x18] sm:$0xf]
      %v1363 = vld [vmem:[%s1355 + $0x1c] sm:$0xf]
      %v1364 = vld [vmem:[%s1355 + $0x20] sm:$0xf]
      %v1365 = vld [vmem:[%s1355 + $0x24] sm:$0xf]
      %v1366 = vld [vmem:[%s1355 + $0x28] sm:$0xf]
      %v1367 = vld [vmem:[%s1355 + $0x2c] sm:$0xf]
      %v1368 = vld [vmem:[%s1355 + $0x30] sm:$0xf]
      %v1369 = vld [vmem:[%s1355 + $0x34] sm:$0xf]
      %v1370 = vld [vmem:[%s1355 + $0x38] sm:$0xf]
      %v1371 = vld [vmem:[%s1355 + $0x3c] sm:$0xf]
      %s1372 = scalar_lea.vmem %s6, 1
      %v1373 = vld [vmem:[%s1372] sm:$0x1]
      %v1374 = vpack.c.bf16 %v1340, %v1339
      %v1375 = vpack.c.bf16 %v1342, %v1341
      %v1376 = vpack.c.bf16 %v1344, %v1343
      %v1377 = vpack.c.bf16 %v1346, %v1345
      %v1378 = vpack.c.bf16 %v1348, %v1347
      %v1379 = vpack.c.bf16 %v1350, %v1349
      %v1380 = vpack.c.bf16 %v1352, %v1351
      %v1381 = vpack.c.bf16 %v1354, %v1353
      %v1383 = vlaneseq
      %v1384 = vshrl.u32 %v1383, 7
      %v1385 = vsub.s32 0, %v1384
      %v1386 = vrot.slane %v1373, %v1385
      %v1404 = vunpack.c.l.b16 %v1356
      %v1405 = vunpack.c.l.b16 %v1357
      %v1406 = vunpack.c.l.b16 %v1358
      %v1407 = vunpack.c.l.b16 %v1359
      %v1408 = vunpack.c.l.b16 %v1360
      %v1409 = vunpack.c.l.b16 %v1361
      %v1410 = vunpack.c.l.b16 %v1362
      %v1411 = vunpack.c.l.b16 %v1363
      %v1412 = vunpack.c.l.b16 %v1364
      %v1413 = vunpack.c.l.b16 %v1365
      %v1414 = vunpack.c.l.b16 %v1366
      %v1415 = vunpack.c.l.b16 %v1367
      %v1416 = vunpack.c.l.b16 %v1368
      %v1417 = vunpack.c.l.b16 %v1369
      %v1418 = vunpack.c.l.b16 %v1370
      %v1419 = vunpack.c.l.b16 %v1371
      %v1420 = vpack.c.b16 %v1405, %v1404
      %v1421 = vpack.c.b16 %v1407, %v1406
      %v1422 = vpack.c.b16 %v1409, %v1408
      %v1423 = vpack.c.b16 %v1411, %v1410
      %v1424 = vpack.c.b16 %v1413, %v1412
      %v1425 = vpack.c.b16 %v1415, %v1414
      %v1426 = vpack.c.b16 %v1417, %v1416
      %v1427 = vpack.c.b16 %v1419, %v1418
      %1436 = vmatprep.subr.bf16.mxu0 0
      %1437 = vmatpush1.bf16.msra.mxu0 %v1420
      %1438 = vmatprep.subr.bf16.mxu0 0
      %1439 = vmatpush1.bf16.msra.mxu0 %v1421
      %1440 = vmatprep.subr.bf16.mxu0 0
      %1441 = vmatpush1.bf16.msra.mxu0 %v1422
      %1442 = vmatprep.subr.bf16.mxu0 0
      %1443 = vmatpush1.bf16.msra.mxu0 %v1423
      %1444 = vmatprep.subr.bf16.mxu0 0
      %1445 = vmatpush1.bf16.msra.mxu0 %v1424
      %1446 = vmatprep.subr.bf16.mxu0 0
      %1447 = vmatpush1.bf16.msra.mxu0 %v1425
      %1448 = vmatprep.subr.bf16.mxu0 0
      %1449 = vmatpush1.bf16.msra.mxu0 %v1426
      %1450 = vmatprep.subr.bf16.mxu0 0
      %1451 = vmatpush1.bf16.msra.mxu0 %v1427
      %1452 = vmatprep.subr.bf16.mxu0 0
      %1453 = vmatpush1.bf16.msra.mxu0 0
      %1454 = vmatprep.subr.bf16.mxu0 0
      %1455 = vmatpush1.bf16.msra.mxu0 0
      %1456 = vmatprep.subr.bf16.mxu0 0
      %1457 = vmatpush1.bf16.msra.mxu0 0
      %1458 = vmatprep.subr.bf16.mxu0 0
      %1459 = vmatpush1.bf16.msra.mxu0 0
      %1460 = vmatprep.subr.bf16.mxu0 0
      %1461 = vmatpush1.bf16.msra.mxu0 0
      %1462 = vmatprep.subr.bf16.mxu0 0
      %1463 = vmatpush1.bf16.msra.mxu0 0
      %1464 = vmatprep.subr.bf16.mxu0 0
      %1465 = vmatpush1.bf16.msra.mxu0 0
      %1466 = vmatprep.subr.bf16.mxu0 0
      %1467 = vmatpush1.bf16.msra.mxu0 0
      %1468 = vmatprep.mubr.bf16.mxu0 0
      %1469 = vmatmul.mubr.bf16.gmra.mrb[0].mxu0 %v1374
      %v1470 = vpop.f32.mrb[0].mxu0
      %v1471 = vadd.f32 %v1386, %v1470
      %v1472 = vpop.f32.mrb[0].mxu0
      %v1473 = vpop.f32.mrb[0].mxu0
      %v1474 = vadd.f32 %v1386, %v1473
      %v1475 = vpop.f32.mrb[0].mxu0
      %1476 = vmatprep.mubr.bf16.mxu0 0
      %1477 = vmatmul.mubr.bf16.gmra.mrb[0].mxu0 %v1375
      %v1478 = vpop.f32.mrb[0].mxu0
      %v1479 = vadd.f32 %v1386, %v1478
      %v1480 = vpop.f32.mrb[0].mxu0
      %v1481 = vpop.f32.mrb[0].mxu0
      %v1482 = vadd.f32 %v1386, %v1481
      %v1483 = vpop.f32.mrb[0].mxu0
      %1484 = vmatprep.mubr.bf16.mxu0 0
      %1485 = vmatmul.mubr.bf16.gmra.mrb[0].mxu0 %v1376
      %v1486 = vpop.f32.mrb[0].mxu0
      %v1487 = vadd.f32 %v1386, %v1486
      %v1488 = vpop.f32.mrb[0].mxu0
      %v1489 = vpop.f32.mrb[0].mxu0
      %v1490 = vadd.f32 %v1386, %v1489
      %v1491 = vpop.f32.mrb[0].mxu0
      %1492 = vmatprep.mubr.bf16.mxu0 0
      %1493 = vmatmul.mubr.bf16.gmra.mrb[0].mxu0 %v1377
      %v1494 = vpop.f32.mrb[0].mxu0
      %v1495 = vadd.f32 %v1386, %v1494
      %v1496 = vpop.f32.mrb[0].mxu0
      %v1497 = vpop.f32.mrb[0].mxu0
      %v1498 = vadd.f32 %v1386, %v1497
      %v1499 = vpop.f32.mrb[0].mxu0
      %1500 = vmatprep.mubr.bf16.mxu0 0
      %1501 = vmatmul.mubr.bf16.gmra.mrb[0].mxu0 %v1378
      %v1502 = vpop.f32.mrb[0].mxu0
      %v1503 = vadd.f32 %v1386, %v1502
      %v1504 = vpop.f32.mrb[0].mxu0
      %v1505 = vpop.f32.mrb[0].mxu0
      %v1506 = vadd.f32 %v1386, %v1505
      %v1507 = vpop.f32.mrb[0].mxu0
      %1508 = vmatprep.mubr.bf16.mxu0 0
      %1509 = vmatmul.mubr.bf16.gmra.mrb[0].mxu0 %v1379
      %v1510 = vpop.f32.mrb[0].mxu0
      %v1511 = vadd.f32 %v1386, %v1510
      %v1512 = vpop.f32.mrb[0].mxu0
      %v1513 = vpop.f32.mrb[0].mxu0
      %v1514 = vadd.f32 %v1386, %v1513
      %v1515 = vpop.f32.mrb[0].mxu0
      %1516 = vmatprep.mubr.bf16.mxu0 0
      %1517 = vmatmul.mubr.bf16.gmra.mrb[0].mxu0 %v1380
      %v1518 = vpop.f32.mrb[0].mxu0
      %v1519 = vadd.f32 %v1386, %v1518
      %v1520 = vpop.f32.mrb[0].mxu0
      %v1521 = vpop.f32.mrb[0].mxu0
      %v1522 = vadd.f32 %v1386, %v1521
      %v1523 = vpop.f32.mrb[0].mxu0
      %1524 = vmatprep.mubr.bf16.mxu0 0
      %1525 = vmatmul.mubr.bf16.gmra.mrb[0].mxu0 %v1381
      %v1526 = vpop.f32.mrb[0].mxu0
      %v1527 = vadd.f32 %v1386, %v1526
      %v1528 = vpop.f32.mrb[0].mxu0
      %v1529 = vpop.f32.mrb[0].mxu0
      %v1530 = vadd.f32 %v1386, %v1529
      %v1531 = vpop.f32.mrb[0].mxu0
      %1532 = vdwg.mxu0
      %v1533 = vadd.f32 %v1471, %v1145
      %v1534 = vadd.f32 %v1474, %v1146
      %v1535 = vadd.f32 %v1479, %v1147
      %v1536 = vadd.f32 %v1482, %v1148
      %v1537 = vadd.f32 %v1487, %v1149
      %v1538 = vadd.f32 %v1490, %v1150
      %v1539 = vadd.f32 %v1495, %v1151
      %v1540 = vadd.f32 %v1498, %v1152
      %v1541 = vadd.f32 %v1503, %v1153
      %v1542 = vadd.f32 %v1506, %v1154
      %v1543 = vadd.f32 %v1511, %v1155
      %v1544 = vadd.f32 %v1514, %v1156
      %v1545 = vadd.f32 %v1519, %v1157
      %v1546 = vadd.f32 %v1522, %v1158
      %v1547 = vadd.f32 %v1527, %v1159
      %v1548 = vadd.f32 %v1530, %v1160
      %v1549 = vmax.f32 %v1533, 0.0
      %v1550 = vmax.f32 %v1534, 0.0
      %v1551 = vmax.f32 %v1535, 0.0
      %v1552 = vmax.f32 %v1536, 0.0
      %v1553 = vmax.f32 %v1537, 0.0
      %v1554 = vmax.f32 %v1538, 0.0
      %v1555 = vmax.f32 %v1539, 0.0
      %v1556 = vmax.f32 %v1540, 0.0
      %v1557 = vmax.f32 %v1541, 0.0
      %v1558 = vmax.f32 %v1542, 0.0
      %v1559 = vmax.f32 %v1543, 0.0
      %v1560 = vmax.f32 %v1544, 0.0
      %v1561 = vmax.f32 %v1545, 0.0
      %v1562 = vmax.f32 %v1546, 0.0
      %v1563 = vmax.f32 %v1547, 0.0
      %v1564 = vmax.f32 %v1548, 0.0
      %v1565 = vld [vmem:[%s7] sm:$0xf]
      %v1566 = vld [vmem:[%s7 + $0x4] sm:$0xf]
      %v1567 = vld [vmem:[%s7 + $0x8] sm:$0xf]
      %v1568 = vld [vmem:[%s7 + $0xc] sm:$0xf]
      %v1569 = vld [vmem:[%s7 + $0x10] sm:$0xf]
      %v1570 = vld [vmem:[%s7 + $0x14] sm:$0xf]
      %v1571 = vld [vmem:[%s7 + $0x18] sm:$0xf]
      %v1572 = vld [vmem:[%s7 + $0x1c] sm:$0xf]
      %v1573 = vld [vmem:[%s7 + $0x20] sm:$0xf]
      %v1574 = vld [vmem:[%s7 + $0x24] sm:$0xf]
      %v1575 = vld [vmem:[%s7 + $0x28] sm:$0xf]
      %v1576 = vld [vmem:[%s7 + $0x2c] sm:$0xf]
      %v1577 = vld [vmem:[%s7 + $0x30] sm:$0xf]
      %v1578 = vld [vmem:[%s7 + $0x34] sm:$0xf]
      %v1579 = vld [vmem:[%s7 + $0x38] sm:$0xf]
      %v1580 = vld [vmem:[%s7 + $0x3c] sm:$0xf]
      %v1581 = vld [vmem:[%s8] sm:$0x1]
      %v1582 = vpack.c.bf16 %v1550, %v1549
      %v1583 = vpack.c.bf16 %v1552, %v1551
      %v1584 = vpack.c.bf16 %v1554, %v1553
      %v1585 = vpack.c.bf16 %v1556, %v1555
      %v1586 = vpack.c.bf16 %v1558, %v1557
      %v1587 = vpack.c.bf16 %v1560, %v1559
      %v1588 = vpack.c.bf16 %v1562, %v1561
      %v1589 = vpack.c.bf16 %v1564, %v1563
      %v1591 = vlaneseq
      %v1592 = vshrl.u32 %v1591, 7
      %v1593 = vsub.s32 0, %v1592
      %v1594 = vrot.slane %v1581, %v1593
      %v1612 = vunpack.c.l.b16 %v1565
      %v1613 = vunpack.c.l.b16 %v1566
      %v1614 = vunpack.c.l.b16 %v1567
      %v1615 = vunpack.c.l.b16 %v1568
      %v1616 = vunpack.c.l.b16 %v1569
      %v1617 = vunpack.c.l.b16 %v1570
      %v1618 = vunpack.c.l.b16 %v1571
      %v1619 = vunpack.c.l.b16 %v1572
      %v1620 = vunpack.c.l.b16 %v1573
      %v1621 = vunpack.c.l.b16 %v1574
      %v1622 = vunpack.c.l.b16 %v1575
      %v1623 = vunpack.c.l.b16 %v1576
      %v1624 = vunpack.c.l.b16 %v1577
      %v1625 = vunpack.c.l.b16 %v1578
      %v1626 = vunpack.c.l.b16 %v1579
      %v1627 = vunpack.c.l.b16 %v1580
      %v1628 = vpack.c.b16 %v1613, %v1612
      %v1629 = vpack.c.b16 %v1615, %v1614
      %v1630 = vpack.c.b16 %v1617, %v1616
      %v1631 = vpack.c.b16 %v1619, %v1618
      %v1632 = vpack.c.b16 %v1621, %v1620
      %v1633 = vpack.c.b16 %v1623, %v1622
      %v1634 = vpack.c.b16 %v1625, %v1624
      %v1635 = vpack.c.b16 %v1627, %v1626
      %1644 = vmatprep.subr.bf16.mxu0 0
      %1645 = vmatpush1.bf16.msra.mxu0 %v1628
      %1646 = vmatprep.subr.bf16.mxu0 0
      %1647 = vmatpush1.bf16.msra.mxu0 %v1629
      %1648 = vmatprep.subr.bf16.mxu0 0
      %1649 = vmatpush1.bf16.msra.mxu0 %v1630
      %1650 = vmatprep.subr.bf16.mxu0 0
      %1651 = vmatpush1.bf16.msra.mxu0 %v1631
      %1652 = vmatprep.subr.bf16.mxu0 0
      %1653 = vmatpush1.bf16.msra.mxu0 %v1632
      %1654 = vmatprep.subr.bf16.mxu0 0
      %1655 = vmatpush1.bf16.msra.mxu0 %v1633
      %1656 = vmatprep.subr.bf16.mxu0 0
      %1657 = vmatpush1.bf16.msra.mxu0 %v1634
      %1658 = vmatprep.subr.bf16.mxu0 0
      %1659 = vmatpush1.bf16.msra.mxu0 %v1635
      %1660 = vmatprep.subr.bf16.mxu0 0
      %1661 = vmatpush1.bf16.msra.mxu0 0
      %1662 = vmatprep.subr.bf16.mxu0 0
      %1663 = vmatpush1.bf16.msra.mxu0 0
      %1664 = vmatprep.subr.bf16.mxu0 0
      %1665 = vmatpush1.bf16.msra.mxu0 0
      %1666 = vmatprep.subr.bf16.mxu0 0
      %1667 = vmatpush1.bf16.msra.mxu0 0
      %1668 = vmatprep.subr.bf16.mxu0 0
      %1669 = vmatpush1.bf16.msra.mxu0 0
      %1670 = vmatprep.subr.bf16.mxu0 0
      %1671 = vmatpush1.bf16.msra.mxu0 0
      %1672 = vmatprep.subr.bf16.mxu0 0
      %1673 = vmatpush1.bf16.msra.mxu0 0
      %1674 = vmatprep.subr.bf16.mxu0 0
      %1675 = vmatpush1.bf16.msra.mxu0 0
      %1676 = vmatprep.mubr.bf16.mxu0 0
      %1677 = vmatmul.mubr.bf16.gmra.mrb[0].mxu0 %v1582
      %v1678 = vpop.f32.mrb[0].mxu0
      %v1679 = vadd.f32 %v1594, %v1678
      %v1680 = vpop.f32.mrb[0].mxu0
      %v1681 = vpop.f32.mrb[0].mxu0
      %v1682 = vadd.f32 %v1594, %v1681
      %v1683 = vpop.f32.mrb[0].mxu0
      %1684 = vmatprep.mubr.bf16.mxu0 0
      %1685 = vmatmul.mubr.bf16.gmra.mrb[0].mxu0 %v1583
      %v1686 = vpop.f32.mrb[0].mxu0
      %v1687 = vadd.f32 %v1594, %v1686
      %v1688 = vpop.f32.mrb[0].mxu0
      %v1689 = vpop.f32.mrb[0].mxu0
      %v1690 = vadd.f32 %v1594, %v1689
      %v1691 = vpop.f32.mrb[0].mxu0
      %1692 = vmatprep.mubr.bf16.mxu0 0
      %1693 = vmatmul.mubr.bf16.gmra.mrb[0].mxu0 %v1584
      %v1694 = vpop.f32.mrb[0].mxu0
      %v1695 = vadd.f32 %v1594, %v1694
      %v1696 = vpop.f32.mrb[0].mxu0
      %v1697 = vpop.f32.mrb[0].mxu0
      %v1698 = vadd.f32 %v1594, %v1697
      %v1699 = vpop.f32.mrb[0].mxu0
      %1700 = vmatprep.mubr.bf16.mxu0 0
      %1701 = vmatmul.mubr.bf16.gmra.mrb[0].mxu0 %v1585
      %v1702 = vpop.f32.mrb[0].mxu0
      %v1703 = vadd.f32 %v1594, %v1702
      %v1704 = vpop.f32.mrb[0].mxu0
      %v1705 = vpop.f32.mrb[0].mxu0
      %v1706 = vadd.f32 %v1594, %v1705
      %v1707 = vpop.f32.mrb[0].mxu0
      %1708 = vmatprep.mubr.bf16.mxu0 0
      %1709 = vmatmul.mubr.bf16.gmra.mrb[0].mxu0 %v1586
      %v1710 = vpop.f32.mrb[0].mxu0
      %v1711 = vadd.f32 %v1594, %v1710
      %v1712 = vpop.f32.mrb[0].mxu0
      %v1713 = vpop.f32.mrb[0].mxu0
      %v1714 = vadd.f32 %v1594, %v1713
      %v1715 = vpop.f32.mrb[0].mxu0
      %1716 = vmatprep.mubr.bf16.mxu0 0
      %1717 = vmatmul.mubr.bf16.gmra.mrb[0].mxu0 %v1587
      %v1718 = vpop.f32.mrb[0].mxu0
      %v1719 = vadd.f32 %v1594, %v1718
      %v1720 = vpop.f32.mrb[0].mxu0
      %v1721 = vpop.f32.mrb[0].mxu0
      %v1722 = vadd.f32 %v1594, %v1721
      %v1723 = vpop.f32.mrb[0].mxu0
      %1724 = vmatprep.mubr.bf16.mxu0 0
      %1725 = vmatmul.mubr.bf16.gmra.mrb[0].mxu0 %v1588
      %v1726 = vpop.f32.mrb[0].mxu0
      %v1727 = vadd.f32 %v1594, %v1726
      %v1728 = vpop.f32.mrb[0].mxu0
      %v1729 = vpop.f32.mrb[0].mxu0
      %v1730 = vadd.f32 %v1594, %v1729
      %v1731 = vpop.f32.mrb[0].mxu0
      %1732 = vmatprep.mubr.bf16.mxu0 0
      %1733 = vmatmul.mubr.bf16.gmra.mrb[0].mxu0 %v1589
      %v1734 = vpop.f32.mrb[0].mxu0
      %v1735 = vadd.f32 %v1594, %v1734
      %v1736 = vpop.f32.mrb[0].mxu0
      %v1737 = vpop.f32.mrb[0].mxu0
      %v1738 = vadd.f32 %v1594, %v1737
      %v1739 = vpop.f32.mrb[0].mxu0
      %1740 = vdwg.mxu0
      %v1741 = vmax.f32 %v1679, 0.0
      %v1742 = vmax.f32 %v1682, 0.0
      %v1743 = vmax.f32 %v1687, 0.0
      %v1744 = vmax.f32 %v1690, 0.0
      %v1745 = vmax.f32 %v1695, 0.0
      %v1746 = vmax.f32 %v1698, 0.0
      %v1747 = vmax.f32 %v1703, 0.0
      %v1748 = vmax.f32 %v1706, 0.0
      %v1749 = vmax.f32 %v1711, 0.0
      %v1750 = vmax.f32 %v1714, 0.0
      %v1751 = vmax.f32 %v1719, 0.0
      %v1752 = vmax.f32 %v1722, 0.0
      %v1753 = vmax.f32 %v1727, 0.0
      %v1754 = vmax.f32 %v1730, 0.0
      %v1755 = vmax.f32 %v1735, 0.0
      %v1756 = vmax.f32 %v1738, 0.0
      %v1757 = vld [vmem:[%s9] sm:$0xf]
      %v1758 = vld [vmem:[%s9 + $0x4] sm:$0xf]
      %v1759 = vld [vmem:[%s9 + $0x8] sm:$0xf]
      %v1760 = vld [vmem:[%s9 + $0xc] sm:$0xf]
      %v1761 = vld [vmem:[%s9 + $0x10] sm:$0xf]
      %v1762 = vld [vmem:[%s9 + $0x14] sm:$0xf]
      %v1763 = vld [vmem:[%s9 + $0x18] sm:$0xf]
      %v1764 = vld [vmem:[%s9 + $0x1c] sm:$0xf]
      %v1765 = vld [vmem:[%s9 + $0x20] sm:$0xf]
      %v1766 = vld [vmem:[%s9 + $0x24] sm:$0xf]
      %v1767 = vld [vmem:[%s9 + $0x28] sm:$0xf]
      %v1768 = vld [vmem:[%s9 + $0x2c] sm:$0xf]
      %v1769 = vld [vmem:[%s9 + $0x30] sm:$0xf]
      %v1770 = vld [vmem:[%s9 + $0x34] sm:$0xf]
      %v1771 = vld [vmem:[%s9 + $0x38] sm:$0xf]
      %v1772 = vld [vmem:[%s9 + $0x3c] sm:$0xf]
      %v1773 = vld [vmem:[%s10] sm:$0x1]
      %v1774 = vpack.c.bf16 %v1742, %v1741
      %v1775 = vpack.c.bf16 %v1744, %v1743
      %v1776 = vpack.c.bf16 %v1746, %v1745
      %v1777 = vpack.c.bf16 %v1748, %v1747
      %v1778 = vpack.c.bf16 %v1750, %v1749
      %v1779 = vpack.c.bf16 %v1752, %v1751
      %v1780 = vpack.c.bf16 %v1754, %v1753
      %v1781 = vpack.c.bf16 %v1756, %v1755
      %v1783 = vlaneseq
      %v1784 = vshrl.u32 %v1783, 7
      %v1785 = vsub.s32 0, %v1784
      %v1786 = vrot.slane %v1773, %v1785
      %v1804 = vunpack.c.l.b16 %v1757
      %v1805 = vunpack.c.l.b16 %v1758
      %v1806 = vunpack.c.l.b16 %v1759
      %v1807 = vunpack.c.l.b16 %v1760
      %v1808 = vunpack.c.l.b16 %v1761
      %v1809 = vunpack.c.l.b16 %v1762
      %v1810 = vunpack.c.l.b16 %v1763
      %v1811 = vunpack.c.l.b16 %v1764
      %v1812 = vunpack.c.l.b16 %v1765
      %v1813 = vunpack.c.l.b16 %v1766
      %v1814 = vunpack.c.l.b16 %v1767
      %v1815 = vunpack.c.l.b16 %v1768
      %v1816 = vunpack.c.l.b16 %v1769
      %v1817 = vunpack.c.l.b16 %v1770
      %v1818 = vunpack.c.l.b16 %v1771
      %v1819 = vunpack.c.l.b16 %v1772
      %v1820 = vpack.c.b16 %v1805, %v1804
      %v1821 = vpack.c.b16 %v1807, %v1806
      %v1822 = vpack.c.b16 %v1809, %v1808
      %v1823 = vpack.c.b16 %v1811, %v1810
      %v1824 = vpack.c.b16 %v1813, %v1812
      %v1825 = vpack.c.b16 %v1815, %v1814
      %v1826 = vpack.c.b16 %v1817, %v1816
      %v1827 = vpack.c.b16 %v1819, %v1818
      %1836 = vmatprep.subr.bf16.mxu0 0
      %1837 = vmatpush1.bf16.msra.mxu0 %v1820
      %1838 = vmatprep.subr.bf16.mxu0 0
      %1839 = vmatpush1.bf16.msra.mxu0 %v1821
      %1840 = vmatprep.subr.bf16.mxu0 0
      %1841 = vmatpush1.bf16.msra.mxu0 %v1822
      %1842 = vmatprep.subr.bf16.mxu0 0
      %1843 = vmatpush1.bf16.msra.mxu0 %v1823
      %1844 = vmatprep.subr.bf16.mxu0 0
      %1845 = vmatpush1.bf16.msra.mxu0 %v1824
      %1846 = vmatprep.subr.bf16.mxu0 0
      %1847 = vmatpush1.bf16.msra.mxu0 %v1825
      %1848 = vmatprep.subr.bf16.mxu0 0
      %1849 = vmatpush1.bf16.msra.mxu0 %v1826
      %1850 = vmatprep.subr.bf16.mxu0 0
      %1851 = vmatpush1.bf16.msra.mxu0 %v1827
      %1852 = vmatprep.subr.bf16.mxu0 0
      %1853 = vmatpush1.bf16.msra.mxu0 0
      %1854 = vmatprep.subr.bf16.mxu0 0
      %1855 = vmatpush1.bf16.msra.mxu0 0
      %1856 = vmatprep.subr.bf16.mxu0 0
      %1857 = vmatpush1.bf16.msra.mxu0 0
      %1858 = vmatprep.subr.bf16.mxu0 0
      %1859 = vmatpush1.bf16.msra.mxu0 0
      %1860 = vmatprep.subr.bf16.mxu0 0
      %1861 = vmatpush1.bf16.msra.mxu0 0
      %1862 = vmatprep.subr.bf16.mxu0 0
      %1863 = vmatpush1.bf16.msra.mxu0 0
      %1864 = vmatprep.subr.bf16.mxu0 0
      %1865 = vmatpush1.bf16.msra.mxu0 0
      %1866 = vmatprep.subr.bf16.mxu0 0
      %1867 = vmatpush1.bf16.msra.mxu0 0
      %1868 = vmatprep.mubr.bf16.mxu0 0
      %1869 = vmatmul.mubr.bf16.gmra.mrb[0].mxu0 %v1774
      %v1870 = vpop.f32.mrb[0].mxu0
      %v1871 = vadd.f32 %v1786, %v1870
      %v1872 = vpop.f32.mrb[0].mxu0
      %v1873 = vpop.f32.mrb[0].mxu0
      %v1874 = vadd.f32 %v1786, %v1873
      %v1875 = vpop.f32.mrb[0].mxu0
      %1876 = vmatprep.mubr.bf16.mxu0 0
      %1877 = vmatmul.mubr.bf16.gmra.mrb[0].mxu0 %v1775
      %v1878 = vpop.f32.mrb[0].mxu0
      %v1879 = vadd.f32 %v1786, %v1878
      %v1880 = vpop.f32.mrb[0].mxu0
      %v1881 = vpop.f32.mrb[0].mxu0
      %v1882 = vadd.f32 %v1786, %v1881
      %v1883 = vpop.f32.mrb[0].mxu0
      %1884 = vmatprep.mubr.bf16.mxu0 0
      %1885 = vmatmul.mubr.bf16.gmra.mrb[0].mxu0 %v1776
      %v1886 = vpop.f32.mrb[0].mxu0
      %v1887 = vadd.f32 %v1786, %v1886
      %v1888 = vpop.f32.mrb[0].mxu0
      %v1889 = vpop.f32.mrb[0].mxu0
      %v1890 = vadd.f32 %v1786, %v1889
      %v1891 = vpop.f32.mrb[0].mxu0
      %1892 = vmatprep.mubr.bf16.mxu0 0
      %1893 = vmatmul.mubr.bf16.gmra.mrb[0].mxu0 %v1777
      %v1894 = vpop.f32.mrb[0].mxu0
      %v1895 = vadd.f32 %v1786, %v1894
      %v1896 = vpop.f32.mrb[0].mxu0
      %v1897 = vpop.f32.mrb[0].mxu0
      %v1898 = vadd.f32 %v1786, %v1897
      %v1899 = vpop.f32.mrb[0].mxu0
      %1900 = vmatprep.mubr.bf16.mxu0 0
      %1901 = vmatmul.mubr.bf16.gmra.mrb[0].mxu0 %v1778
      %v1902 = vpop.f32.mrb[0].mxu0
      %v1903 = vadd.f32 %v1786, %v1902
      %v1904 = vpop.f32.mrb[0].mxu0
      %v1905 = vpop.f32.mrb[0].mxu0
      %v1906 = vadd.f32 %v1786, %v1905
      %v1907 = vpop.f32.mrb[0].mxu0
      %1908 = vmatprep.mubr.bf16.mxu0 0
      %1909 = vmatmul.mubr.bf16.gmra.mrb[0].mxu0 %v1779
      %v1910 = vpop.f32.mrb[0].mxu0
      %v1911 = vadd.f32 %v1786, %v1910
      %v1912 = vpop.f32.mrb[0].mxu0
      %v1913 = vpop.f32.mrb[0].mxu0
      %v1914 = vadd.f32 %v1786, %v1913
      %v1915 = vpop.f32.mrb[0].mxu0
      %1916 = vmatprep.mubr.bf16.mxu0 0
      %1917 = vmatmul.mubr.bf16.gmra.mrb[0].mxu0 %v1780
      %v1918 = vpop.f32.mrb[0].mxu0
      %v1919 = vadd.f32 %v1786, %v1918
      %v1920 = vpop.f32.mrb[0].mxu0
      %v1921 = vpop.f32.mrb[0].mxu0
      %v1922 = vadd.f32 %v1786, %v1921
      %v1923 = vpop.f32.mrb[0].mxu0
      %1924 = vmatprep.mubr.bf16.mxu0 0
      %1925 = vmatmul.mubr.bf16.gmra.mrb[0].mxu0 %v1781
      %v1926 = vpop.f32.mrb[0].mxu0
      %v1927 = vadd.f32 %v1786, %v1926
      %v1928 = vpop.f32.mrb[0].mxu0
      %v1929 = vpop.f32.mrb[0].mxu0
      %v1930 = vadd.f32 %v1786, %v1929
      %v1931 = vpop.f32.mrb[0].mxu0
      %1932 = vdwg.mxu0
      %v1933 = vmax.f32 %v1871, 0.0
      %v1934 = vmax.f32 %v1874, 0.0
      %v1935 = vmax.f32 %v1879, 0.0
      %v1936 = vmax.f32 %v1882, 0.0
      %v1937 = vmax.f32 %v1887, 0.0
      %v1938 = vmax.f32 %v1890, 0.0
      %v1939 = vmax.f32 %v1895, 0.0
      %v1940 = vmax.f32 %v1898, 0.0
      %v1941 = vmax.f32 %v1903, 0.0
      %v1942 = vmax.f32 %v1906, 0.0
      %v1943 = vmax.f32 %v1911, 0.0
      %v1944 = vmax.f32 %v1914, 0.0
      %v1945 = vmax.f32 %v1919, 0.0
      %v1946 = vmax.f32 %v1922, 0.0
      %v1947 = vmax.f32 %v1927, 0.0
      %v1948 = vmax.f32 %v1930, 0.0
      %v1949 = vld [vmem:[%s11] sm:$0xf]
      %v1950 = vld [vmem:[%s11 + $0x4] sm:$0xf]
      %v1951 = vld [vmem:[%s11 + $0x8] sm:$0xf]
      %v1952 = vld [vmem:[%s11 + $0xc] sm:$0xf]
      %v1953 = vld [vmem:[%s11 + $0x10] sm:$0xf]
      %v1954 = vld [vmem:[%s11 + $0x14] sm:$0xf]
      %v1955 = vld [vmem:[%s11 + $0x18] sm:$0xf]
      %v1956 = vld [vmem:[%s11 + $0x1c] sm:$0xf]
      %v1957 = vld [vmem:[%s11 + $0x20] sm:$0xf]
      %v1958 = vld [vmem:[%s11 + $0x24] sm:$0xf]
      %v1959 = vld [vmem:[%s11 + $0x28] sm:$0xf]
      %v1960 = vld [vmem:[%s11 + $0x2c] sm:$0xf]
      %v1961 = vld [vmem:[%s11 + $0x30] sm:$0xf]
      %v1962 = vld [vmem:[%s11 + $0x34] sm:$0xf]
      %v1963 = vld [vmem:[%s11 + $0x38] sm:$0xf]
      %v1964 = vld [vmem:[%s11 + $0x3c] sm:$0xf]
      %v1965 = vld [vmem:[%s12] sm:$0x1]
      %v1966 = vpack.c.bf16 %v1934, %v1933
      %v1967 = vpack.c.bf16 %v1936, %v1935
      %v1968 = vpack.c.bf16 %v1938, %v1937
      %v1969 = vpack.c.bf16 %v1940, %v1939
      %v1970 = vpack.c.bf16 %v1942, %v1941
      %v1971 = vpack.c.bf16 %v1944, %v1943
      %v1972 = vpack.c.bf16 %v1946, %v1945
      %v1973 = vpack.c.bf16 %v1948, %v1947
      %v1975 = vlaneseq
      %v1976 = vshrl.u32 %v1975, 7
      %v1977 = vsub.s32 0, %v1976
      %v1978 = vrot.slane %v1965, %v1977
      %v1996 = vunpack.c.l.b16 %v1949
      %v1997 = vunpack.c.l.b16 %v1950
      %v1998 = vunpack.c.l.b16 %v1951
      %v1999 = vunpack.c.l.b16 %v1952
      %v2000 = vunpack.c.l.b16 %v1953
      %v2001 = vunpack.c.l.b16 %v1954
      %v2002 = vunpack.c.l.b16 %v1955
      %v2003 = vunpack.c.l.b16 %v1956
      %v2004 = vunpack.c.l.b16 %v1957
      %v2005 = vunpack.c.l.b16 %v1958
      %v2006 = vunpack.c.l.b16 %v1959
      %v2007 = vunpack.c.l.b16 %v1960
      %v2008 = vunpack.c.l.b16 %v1961
      %v2009 = vunpack.c.l.b16 %v1962
      %v2010 = vunpack.c.l.b16 %v1963
      %v2011 = vunpack.c.l.b16 %v1964
      %v2012 = vpack.c.b16 %v1997, %v1996
      %v2013 = vpack.c.b16 %v1999, %v1998
      %v2014 = vpack.c.b16 %v2001, %v2000
      %v2015 = vpack.c.b16 %v2003, %v2002
      %v2016 = vpack.c.b16 %v2005, %v2004
      %v2017 = vpack.c.b16 %v2007, %v2006
      %v2018 = vpack.c.b16 %v2009, %v2008
      %v2019 = vpack.c.b16 %v2011, %v2010
      %2028 = vmatprep.subr.bf16.mxu0 0
      %2029 = vmatpush1.bf16.msra.mxu0 %v2012
      %2030 = vmatprep.subr.bf16.mxu0 0
      %2031 = vmatpush1.bf16.msra.mxu0 %v2013
      %2032 = vmatprep.subr.bf16.mxu0 0
      %2033 = vmatpush1.bf16.msra.mxu0 %v2014
      %2034 = vmatprep.subr.bf16.mxu0 0
      %2035 = vmatpush1.bf16.msra.mxu0 %v2015
      %2036 = vmatprep.subr.bf16.mxu0 0
      %2037 = vmatpush1.bf16.msra.mxu0 %v2016
      %2038 = vmatprep.subr.bf16.mxu0 0
      %2039 = vmatpush1.bf16.msra.mxu0 %v2017
      %2040 = vmatprep.subr.bf16.mxu0 0
      %2041 = vmatpush1.bf16.msra.mxu0 %v2018
      %2042 = vmatprep.subr.bf16.mxu0 0
      %2043 = vmatpush1.bf16.msra.mxu0 %v2019
      %2044 = vmatprep.subr.bf16.mxu0 0
      %2045 = vmatpush1.bf16.msra.mxu0 0
      %2046 = vmatprep.subr.bf16.mxu0 0
      %2047 = vmatpush1.bf16.msra.mxu0 0
      %2048 = vmatprep.subr.bf16.mxu0 0
      %2049 = vmatpush1.bf16.msra.mxu0 0
      %2050 = vmatprep.subr.bf16.mxu0 0
      %2051 = vmatpush1.bf16.msra.mxu0 0
      %2052 = vmatprep.subr.bf16.mxu0 0
      %2053 = vmatpush1.bf16.msra.mxu0 0
      %2054 = vmatprep.subr.bf16.mxu0 0
      %2055 = vmatpush1.bf16.msra.mxu0 0
      %2056 = vmatprep.subr.bf16.mxu0 0
      %2057 = vmatpush1.bf16.msra.mxu0 0
      %2058 = vmatprep.subr.bf16.mxu0 0
      %2059 = vmatpush1.bf16.msra.mxu0 0
      %2060 = vmatprep.mubr.bf16.mxu0 0
      %2061 = vmatmul.mubr.bf16.gmra.mrb[0].mxu0 %v1966
      %v2062 = vpop.f32.mrb[0].mxu0
      %v2063 = vadd.f32 %v1978, %v2062
      %v2064 = vpop.f32.mrb[0].mxu0
      %v2065 = vpop.f32.mrb[0].mxu0
      %v2066 = vadd.f32 %v1978, %v2065
      %v2067 = vpop.f32.mrb[0].mxu0
      %2068 = vmatprep.mubr.bf16.mxu0 0
      %2069 = vmatmul.mubr.bf16.gmra.mrb[0].mxu0 %v1967
      %v2070 = vpop.f32.mrb[0].mxu0
      %v2071 = vadd.f32 %v1978, %v2070
      %v2072 = vpop.f32.mrb[0].mxu0
      %v2073 = vpop.f32.mrb[0].mxu0
      %v2074 = vadd.f32 %v1978, %v2073
      %v2075 = vpop.f32.mrb[0].mxu0
      %2076 = vmatprep.mubr.bf16.mxu0 0
      %2077 = vmatmul.mubr.bf16.gmra.mrb[0].mxu0 %v1968
      %v2078 = vpop.f32.mrb[0].mxu0
      %v2079 = vadd.f32 %v1978, %v2078
      %v2080 = vpop.f32.mrb[0].mxu0
      %v2081 = vpop.f32.mrb[0].mxu0
      %v2082 = vadd.f32 %v1978, %v2081
      %v2083 = vpop.f32.mrb[0].mxu0
      %2084 = vmatprep.mubr.bf16.mxu0 0
      %2085 = vmatmul.mubr.bf16.gmra.mrb[0].mxu0 %v1969
      %v2086 = vpop.f32.mrb[0].mxu0
      %v2087 = vadd.f32 %v1978, %v2086
      %v2088 = vpop.f32.mrb[0].mxu0
      %v2089 = vpop.f32.mrb[0].mxu0
      %v2090 = vadd.f32 %v1978, %v2089
      %v2091 = vpop.f32.mrb[0].mxu0
      %2092 = vmatprep.mubr.bf16.mxu0 0
      %2093 = vmatmul.mubr.bf16.gmra.mrb[0].mxu0 %v1970
      %v2094 = vpop.f32.mrb[0].mxu0
      %v2095 = vadd.f32 %v1978, %v2094
      %v2096 = vpop.f32.mrb[0].mxu0
      %v2097 = vpop.f32.mrb[0].mxu0
      %v2098 = vadd.f32 %v1978, %v2097
      %v2099 = vpop.f32.mrb[0].mxu0
      %2100 = vmatprep.mubr.bf16.mxu0 0
      %2101 = vmatmul.mubr.bf16.gmra.mrb[0].mxu0 %v1971
      %v2102 = vpop.f32.mrb[0].mxu0
      %v2103 = vadd.f32 %v1978, %v2102
      %v2104 = vpop.f32.mrb[0].mxu0
      %v2105 = vpop.f32.mrb[0].mxu0
      %v2106 = vadd.f32 %v1978, %v2105
      %v2107 = vpop.f32.mrb[0].mxu0
      %2108 = vmatprep.mubr.bf16.mxu0 0
      %2109 = vmatmul.mubr.bf16.gmra.mrb[0].mxu0 %v1972
      %v2110 = vpop.f32.mrb[0].mxu0
      %v2111 = vadd.f32 %v1978, %v2110
      %v2112 = vpop.f32.mrb[0].mxu0
      %v2113 = vpop.f32.mrb[0].mxu0
      %v2114 = vadd.f32 %v1978, %v2113
      %v2115 = vpop.f32.mrb[0].mxu0
      %2116 = vmatprep.mubr.bf16.mxu0 0
      %2117 = vmatmul.mubr.bf16.gmra.mrb[0].mxu0 %v1973
      %v2118 = vpop.f32.mrb[0].mxu0
      %v2119 = vadd.f32 %v1978, %v2118
      %v2120 = vpop.f32.mrb[0].mxu0
      %v2121 = vpop.f32.mrb[0].mxu0
      %v2122 = vadd.f32 %v1978, %v2121
      %v2123 = vpop.f32.mrb[0].mxu0
      %2124 = vdwg.mxu0
      %v2125 = vtanh.pop %v2063
      %v2126 = vtanh.pop %v2066
      %v2127 = vtanh.pop %v2071
      %v2128 = vtanh.pop %v2074
      %v2129 = vtanh.pop %v2079
      %v2130 = vtanh.pop %v2082
      %v2131 = vtanh.pop %v2087
      %v2132 = vtanh.pop %v2090
      %v2133 = vtanh.pop %v2095
      %v2134 = vtanh.pop %v2098
      %v2135 = vtanh.pop %v2103
      %v2136 = vtanh.pop %v2106
      %v2137 = vtanh.pop %v2111
      %v2138 = vtanh.pop %v2114
      %v2139 = vtanh.pop %v2119
      %v2140 = vtanh.pop %v2122
      %v2141 = vld [vmem:[%s13] sm:$0xf]
      %v2142 = vld [vmem:[%s13 + $0x4] sm:$0xf]
      %v2143 = vld [vmem:[%s13 + $0x8] sm:$0xf]
      %v2144 = vld [vmem:[%s13 + $0xc] sm:$0xf]
      %v2145 = vld [vmem:[%s13 + $0x10] sm:$0xf]
      %v2146 = vld [vmem:[%s13 + $0x14] sm:$0xf]
      %v2147 = vld [vmem:[%s13 + $0x18] sm:$0xf]
      %v2148 = vld [vmem:[%s13 + $0x1c] sm:$0xf]
      %v2149 = vld [vmem:[%s13 + $0x20] sm:$0xf]
      %v2150 = vld [vmem:[%s13 + $0x24] sm:$0xf]
      %v2151 = vld [vmem:[%s13 + $0x28] sm:$0xf]
      %v2152 = vld [vmem:[%s13 + $0x2c] sm:$0xf]
      %v2153 = vld [vmem:[%s13 + $0x30] sm:$0xf]
      %v2154 = vld [vmem:[%s13 + $0x34] sm:$0xf]
      %v2155 = vld [vmem:[%s13 + $0x38] sm:$0xf]
      %v2156 = vld [vmem:[%s13 + $0x3c] sm:$0xf]
      %v2157 = vld [vmem:[%s14] sm:$0x1]
      %v2159 = vlaneseq
      %v2160 = vshrl.u32 %v2159, 7
      %v2161 = vsub.s32 0, %v2160
      %v2162 = vrot.slane %v2157, %v2161
      %v2180 = vunpack.c.l.b16 %v2141
      %v2181 = vunpack.c.l.b16 %v2142
      %v2182 = vunpack.c.l.b16 %v2143
      %v2183 = vunpack.c.l.b16 %v2144
      %v2184 = vunpack.c.l.b16 %v2145
      %v2185 = vunpack.c.l.b16 %v2146
      %v2186 = vunpack.c.l.b16 %v2147
      %v2187 = vunpack.c.l.b16 %v2148
      %v2188 = vunpack.c.l.b16 %v2149
      %v2189 = vunpack.c.l.b16 %v2150
      %v2190 = vunpack.c.l.b16 %v2151
      %v2191 = vunpack.c.l.b16 %v2152
      %v2192 = vunpack.c.l.b16 %v2153
      %v2193 = vunpack.c.l.b16 %v2154
      %v2194 = vunpack.c.l.b16 %v2155
      %v2195 = vunpack.c.l.b16 %v2156
      %v2196 = vpack.c.b16 %v2181, %v2180
      %v2197 = vpack.c.b16 %v2183, %v2182
      %v2198 = vpack.c.b16 %v2185, %v2184
      %v2199 = vpack.c.b16 %v2187, %v2186
      %v2200 = vpack.c.b16 %v2189, %v2188
      %v2201 = vpack.c.b16 %v2191, %v2190
      %v2202 = vpack.c.b16 %v2193, %v2192
      %v2203 = vpack.c.b16 %v2195, %v2194
      %2212 = vmatprep.subr.bf16.mxu0 0
      %2213 = vmatpush1.bf16.msra.mxu0 %v2196
      %2214 = vmatprep.subr.bf16.mxu0 0
      %2215 = vmatpush1.bf16.msra.mxu0 %v2197
      %2216 = vmatprep.subr.bf16.mxu0 0
      %2217 = vmatpush1.bf16.msra.mxu0 %v2198
      %2218 = vmatprep.subr.bf16.mxu0 0
      %2219 = vmatpush1.bf16.msra.mxu0 %v2199
      %2220 = vmatprep.subr.bf16.mxu0 0
      %2221 = vmatpush1.bf16.msra.mxu0 %v2200
      %2222 = vmatprep.subr.bf16.mxu0 0
      %2223 = vmatpush1.bf16.msra.mxu0 %v2201
      %2224 = vmatprep.subr.bf16.mxu0 0
      %2225 = vmatpush1.bf16.msra.mxu0 %v2202
      %2226 = vmatprep.subr.bf16.mxu0 0
      %2227 = vmatpush1.bf16.msra.mxu0 %v2203
      %2228 = vmatprep.subr.bf16.mxu0 0
      %2229 = vmatpush1.bf16.msra.mxu0 0
      %2230 = vmatprep.subr.bf16.mxu0 0
      %2231 = vmatpush1.bf16.msra.mxu0 0
      %2232 = vmatprep.subr.bf16.mxu0 0
      %2233 = vmatpush1.bf16.msra.mxu0 0
      %2234 = vmatprep.subr.bf16.mxu0 0
      %2235 = vmatpush1.bf16.msra.mxu0 0
      %2236 = vmatprep.subr.bf16.mxu0 0
      %2237 = vmatpush1.bf16.msra.mxu0 0
      %2238 = vmatprep.subr.bf16.mxu0 0
      %2239 = vmatpush1.bf16.msra.mxu0 0
      %2240 = vmatprep.subr.bf16.mxu0 0
      %2241 = vmatpush1.bf16.msra.mxu0 0
      %2242 = vmatprep.subr.bf16.mxu0 0
      %2243 = vmatpush1.bf16.msra.mxu0 0
      %2244 = vmatprep.mubr.bf16.mxu0 0
      %2245 = vmatmul.mubr.bf16.gmra.mrb[0].mxu0 %v1582
      %v2246 = vpop.f32.mrb[0].mxu0
      %v2247 = vadd.f32 %v2162, %v2246
      %v2248 = vpop.f32.mrb[0].mxu0
      %v2249 = vpop.f32.mrb[0].mxu0
      %v2250 = vadd.f32 %v2162, %v2249
      %v2251 = vpop.f32.mrb[0].mxu0
      %2252 = vmatprep.mubr.bf16.mxu0 0
      %2253 = vmatmul.mubr.bf16.gmra.mrb[0].mxu0 %v1583
      %v2254 = vpop.f32.mrb[0].mxu0
      %v2255 = vadd.f32 %v2162, %v2254
      %v2256 = vpop.f32.mrb[0].mxu0
      %v2257 = vpop.f32.mrb[0].mxu0
      %v2258 = vadd.f32 %v2162, %v2257
      %v2259 = vpop.f32.mrb[0].mxu0
      %2260 = vmatprep.mubr.bf16.mxu0 0
      %2261 = vmatmul.mubr.bf16.gmra.mrb[0].mxu0 %v1584
      %v2262 = vpop.f32.mrb[0].mxu0
      %v2263 = vadd.f32 %v2162, %v2262
      %v2264 = vpop.f32.mrb[0].mxu0
      %v2265 = vpop.f32.mrb[0].mxu0
      %v2266 = vadd.f32 %v2162, %v2265
      %v2267 = vpop.f32.mrb[0].mxu0
      %2268 = vmatprep.mubr.bf16.mxu0 0
      %2269 = vmatmul.mubr.bf16.gmra.mrb[0].mxu0 %v1585
      %v2270 = vpop.f32.mrb[0].mxu0
      %v2271 = vadd.f32 %v2162, %v2270
      %v2272 = vpop.f32.mrb[0].mxu0
      %v2273 = vpop.f32.mrb[0].mxu0
      %v2274 = vadd.f32 %v2162, %v2273
      %v2275 = vpop.f32.mrb[0].mxu0
      %2276 = vmatprep.mubr.bf16.mxu0 0
      %2277 = vmatmul.mubr.bf16.gmra.mrb[0].mxu0 %v1586
      %v2278 = vpop.f32.mrb[0].mxu0
      %v2279 = vadd.f32 %v2162, %v2278
      %v2280 = vpop.f32.mrb[0].mxu0
      %v2281 = vpop.f32.mrb[0].mxu0
      %v2282 = vadd.f32 %v2162, %v2281
      %v2283 = vpop.f32.mrb[0].mxu0
      %2284 = vmatprep.mubr.bf16.mxu0 0
      %2285 = vmatmul.mubr.bf16.gmra.mrb[0].mxu0 %v1587
      %v2286 = vpop.f32.mrb[0].mxu0
      %v2287 = vadd.f32 %v2162, %v2286
      %v2288 = vpop.f32.mrb[0].mxu0
      %v2289 = vpop.f32.mrb[0].mxu0
      %v2290 = vadd.f32 %v2162, %v2289
      %v2291 = vpop.f32.mrb[0].mxu0
      %2292 = vmatprep.mubr.bf16.mxu0 0
      %2293 = vmatmul.mubr.bf16.gmra.mrb[0].mxu0 %v1588
      %v2294 = vpop.f32.mrb[0].mxu0
      %v2295 = vadd.f32 %v2162, %v2294
      %v2296 = vpop.f32.mrb[0].mxu0
      %v2297 = vpop.f32.mrb[0].mxu0
      %v2298 = vadd.f32 %v2162, %v2297
      %v2299 = vpop.f32.mrb[0].mxu0
      %2300 = vmatprep.mubr.bf16.mxu0 0
      %2301 = vmatmul.mubr.bf16.gmra.mrb[0].mxu0 %v1589
      %v2302 = vpop.f32.mrb[0].mxu0
      %v2303 = vadd.f32 %v2162, %v2302
      %v2304 = vpop.f32.mrb[0].mxu0
      %v2305 = vpop.f32.mrb[0].mxu0
      %v2306 = vadd.f32 %v2162, %v2305
      %v2307 = vpop.f32.mrb[0].mxu0
      %2308 = vdwg.mxu0
      %v2309 = vmax.f32 %v2247, 0.0
      %v2310 = vmax.f32 %v2250, 0.0
      %v2311 = vmax.f32 %v2255, 0.0
      %v2312 = vmax.f32 %v2258, 0.0
      %v2313 = vmax.f32 %v2263, 0.0
      %v2314 = vmax.f32 %v2266, 0.0
      %v2315 = vmax.f32 %v2271, 0.0
      %v2316 = vmax.f32 %v2274, 0.0
      %v2317 = vmax.f32 %v2279, 0.0
      %v2318 = vmax.f32 %v2282, 0.0
      %v2319 = vmax.f32 %v2287, 0.0
      %v2320 = vmax.f32 %v2290, 0.0
      %v2321 = vmax.f32 %v2295, 0.0
      %v2322 = vmax.f32 %v2298, 0.0
      %v2323 = vmax.f32 %v2303, 0.0
      %v2324 = vmax.f32 %v2306, 0.0
      %v2325 = vld [vmem:[%s15] sm:$0xf]
      %v2326 = vld [vmem:[%s15 + $0x4] sm:$0xf]
      %v2327 = vld [vmem:[%s15 + $0x8] sm:$0xf]
      %v2328 = vld [vmem:[%s15 + $0xc] sm:$0xf]
      %v2329 = vld [vmem:[%s15 + $0x10] sm:$0xf]
      %v2330 = vld [vmem:[%s15 + $0x14] sm:$0xf]
      %v2331 = vld [vmem:[%s15 + $0x18] sm:$0xf]
      %v2332 = vld [vmem:[%s15 + $0x1c] sm:$0xf]
      %v2333 = vld [vmem:[%s15 + $0x20] sm:$0xf]
      %v2334 = vld [vmem:[%s15 + $0x24] sm:$0xf]
      %v2335 = vld [vmem:[%s15 + $0x28] sm:$0xf]
      %v2336 = vld [vmem:[%s15 + $0x2c] sm:$0xf]
      %v2337 = vld [vmem:[%s15 + $0x30] sm:$0xf]
      %v2338 = vld [vmem:[%s15 + $0x34] sm:$0xf]
      %v2339 = vld [vmem:[%s15 + $0x38] sm:$0xf]
      %v2340 = vld [vmem:[%s15 + $0x3c] sm:$0xf]
      %v2341 = vld [vmem:[%s16] sm:$0x1]
      %v2342 = vpack.c.bf16 %v2310, %v2309
      %v2343 = vpack.c.bf16 %v2312, %v2311
      %v2344 = vpack.c.bf16 %v2314, %v2313
      %v2345 = vpack.c.bf16 %v2316, %v2315
      %v2346 = vpack.c.bf16 %v2318, %v2317
      %v2347 = vpack.c.bf16 %v2320, %v2319
      %v2348 = vpack.c.bf16 %v2322, %v2321
      %v2349 = vpack.c.bf16 %v2324, %v2323
      %v2351 = vlaneseq
      %v2352 = vshrl.u32 %v2351, 7
      %v2353 = vsub.s32 0, %v2352
      %v2354 = vrot.slane %v2341, %v2353
      %v2372 = vunpack.c.l.b16 %v2325
      %v2373 = vunpack.c.l.b16 %v2326
      %v2374 = vunpack.c.l.b16 %v2327
      %v2375 = vunpack.c.l.b16 %v2328
      %v2376 = vunpack.c.l.b16 %v2329
      %v2377 = vunpack.c.l.b16 %v2330
      %v2378 = vunpack.c.l.b16 %v2331
      %v2379 = vunpack.c.l.b16 %v2332
      %v2380 = vunpack.c.l.b16 %v2333
      %v2381 = vunpack.c.l.b16 %v2334
      %v2382 = vunpack.c.l.b16 %v2335
      %v2383 = vunpack.c.l.b16 %v2336
      %v2384 = vunpack.c.l.b16 %v2337
      %v2385 = vunpack.c.l.b16 %v2338
      %v2386 = vunpack.c.l.b16 %v2339
      %v2387 = vunpack.c.l.b16 %v2340
      %v2388 = vpack.c.b16 %v2373, %v2372
      %v2389 = vpack.c.b16 %v2375, %v2374
      %v2390 = vpack.c.b16 %v2377, %v2376
      %v2391 = vpack.c.b16 %v2379, %v2378
      %v2392 = vpack.c.b16 %v2381, %v2380
      %v2393 = vpack.c.b16 %v2383, %v2382
      %v2394 = vpack.c.b16 %v2385, %v2384
      %v2395 = vpack.c.b16 %v2387, %v2386
      %2404 = vmatprep.subr.bf16.mxu0 0
      %2405 = vmatpush1.bf16.msra.mxu0 %v2388
      %2406 = vmatprep.subr.bf16.mxu0 0
      %2407 = vmatpush1.bf16.msra.mxu0 %v2389
      %2408 = vmatprep.subr.bf16.mxu0 0
      %2409 = vmatpush1.bf16.msra.mxu0 %v2390
      %2410 = vmatprep.subr.bf16.mxu0 0
      %2411 = vmatpush1.bf16.msra.mxu0 %v2391
      %2412 = vmatprep.subr.bf16.mxu0 0
      %2413 = vmatpush1.bf16.msra.mxu0 %v2392
      %2414 = vmatprep.subr.bf16.mxu0 0
      %2415 = vmatpush1.bf16.msra.mxu0 %v2393
      %2416 = vmatprep.subr.bf16.mxu0 0
      %2417 = vmatpush1.bf16.msra.mxu0 %v2394
      %2418 = vmatprep.subr.bf16.mxu0 0
      %2419 = vmatpush1.bf16.msra.mxu0 %v2395
      %2420 = vmatprep.subr.bf16.mxu0 0
      %2421 = vmatpush1.bf16.msra.mxu0 0
      %2422 = vmatprep.subr.bf16.mxu0 0
      %2423 = vmatpush1.bf16.msra.mxu0 0
      %2424 = vmatprep.subr.bf16.mxu0 0
      %2425 = vmatpush1.bf16.msra.mxu0 0
      %2426 = vmatprep.subr.bf16.mxu0 0
      %2427 = vmatpush1.bf16.msra.mxu0 0
      %2428 = vmatprep.subr.bf16.mxu0 0
      %2429 = vmatpush1.bf16.msra.mxu0 0
      %2430 = vmatprep.subr.bf16.mxu0 0
      %2431 = vmatpush1.bf16.msra.mxu0 0
      %2432 = vmatprep.subr.bf16.mxu0 0
      %2433 = vmatpush1.bf16.msra.mxu0 0
      %2434 = vmatprep.subr.bf16.mxu0 0
      %2435 = vmatpush1.bf16.msra.mxu0 0
      %2436 = vmatprep.mubr.bf16.mxu0 0
      %2437 = vmatmul.mubr.bf16.gmra.mrb[0].mxu0 %v2342
      %v2438 = vpop.f32.mrb[0].mxu0
      %v2439 = vadd.f32 %v2354, %v2438
      %v2440 = vpop.f32.mrb[0].mxu0
      %v2441 = vpop.f32.mrb[0].mxu0
      %v2442 = vadd.f32 %v2354, %v2441
      %v2443 = vpop.f32.mrb[0].mxu0
      %2444 = vmatprep.mubr.bf16.mxu0 0
      %2445 = vmatmul.mubr.bf16.gmra.mrb[0].mxu0 %v2343
      %v2446 = vpop.f32.mrb[0].mxu0
      %v2447 = vadd.f32 %v2354, %v2446
      %v2448 = vpop.f32.mrb[0].mxu0
      %v2449 = vpop.f32.mrb[0].mxu0
      %v2450 = vadd.f32 %v2354, %v2449
      %v2451 = vpop.f32.mrb[0].mxu0
      %2452 = vmatprep.mubr.bf16.mxu0 0
      %2453 = vmatmul.mubr.bf16.gmra.mrb[0].mxu0 %v2344
      %v2454 = vpop.f32.mrb[0].mxu0
      %v2455 = vadd.f32 %v2354, %v2454
      %v2456 = vpop.f32.mrb[0].mxu0
      %v2457 = vpop.f32.mrb[0].mxu0
      %v2458 = vadd.f32 %v2354, %v2457
      %v2459 = vpop.f32.mrb[0].mxu0
      %2460 = vmatprep.mubr.bf16.mxu0 0
      %2461 = vmatmul.mubr.bf16.gmra.mrb[0].mxu0 %v2345
      %v2462 = vpop.f32.mrb[0].mxu0
      %v2463 = vadd.f32 %v2354, %v2462
      %v2464 = vpop.f32.mrb[0].mxu0
      %v2465 = vpop.f32.mrb[0].mxu0
      %v2466 = vadd.f32 %v2354, %v2465
      %v2467 = vpop.f32.mrb[0].mxu0
      %2468 = vmatprep.mubr.bf16.mxu0 0
      %2469 = vmatmul.mubr.bf16.gmra.mrb[0].mxu0 %v2346
      %v2470 = vpop.f32.mrb[0].mxu0
      %v2471 = vadd.f32 %v2354, %v2470
      %v2472 = vpop.f32.mrb[0].mxu0
      %v2473 = vpop.f32.mrb[0].mxu0
      %v2474 = vadd.f32 %v2354, %v2473
      %v2475 = vpop.f32.mrb[0].mxu0
      %2476 = vmatprep.mubr.bf16.mxu0 0
      %2477 = vmatmul.mubr.bf16.gmra.mrb[0].mxu0 %v2347
      %v2478 = vpop.f32.mrb[0].mxu0
      %v2479 = vadd.f32 %v2354, %v2478
      %v2480 = vpop.f32.mrb[0].mxu0
      %v2481 = vpop.f32.mrb[0].mxu0
      %v2482 = vadd.f32 %v2354, %v2481
      %v2483 = vpop.f32.mrb[0].mxu0
      %2484 = vmatprep.mubr.bf16.mxu0 0
      %2485 = vmatmul.mubr.bf16.gmra.mrb[0].mxu0 %v2348
      %v2486 = vpop.f32.mrb[0].mxu0
      %v2487 = vadd.f32 %v2354, %v2486
      %v2488 = vpop.f32.mrb[0].mxu0
      %v2489 = vpop.f32.mrb[0].mxu0
      %v2490 = vadd.f32 %v2354, %v2489
      %v2491 = vpop.f32.mrb[0].mxu0
      %2492 = vmatprep.mubr.bf16.mxu0 0
      %2493 = vmatmul.mubr.bf16.gmra.mrb[0].mxu0 %v2349
      %v2494 = vpop.f32.mrb[0].mxu0
      %v2495 = vadd.f32 %v2354, %v2494
      %v2496 = vpop.f32.mrb[0].mxu0
      %v2497 = vpop.f32.mrb[0].mxu0
      %v2498 = vadd.f32 %v2354, %v2497
      %v2499 = vpop.f32.mrb[0].mxu0
      %2500 = vdwg.mxu0
      %2501 = vmax.xlane.f32.xlu0 %v2439
      %v2502 = vpop.xlane.xlu0 %2501
      %2503 = vmax.xlane.f32.xlu0 %v2442
      %v2504 = vpop.xlane.xlu0 %2503
      %2505 = vmax.xlane.f32.xlu0 %v2447
      %v2506 = vpop.xlane.xlu0 %2505
      %2507 = vmax.xlane.f32.xlu0 %v2450
      %v2508 = vpop.xlane.xlu0 %2507
      %2509 = vmax.xlane.f32.xlu0 %v2455
      %v2510 = vpop.xlane.xlu0 %2509
      %2511 = vmax.xlane.f32.xlu0 %v2458
      %v2512 = vpop.xlane.xlu0 %2511
      %2513 = vmax.xlane.f32.xlu0 %v2463
      %v2514 = vpop.xlane.xlu0 %2513
      %2515 = vmax.xlane.f32.xlu0 %v2466
      %v2516 = vpop.xlane.xlu0 %2515
      %2517 = vmax.xlane.f32.xlu0 %v2471
      %v2518 = vpop.xlane.xlu0 %2517
      %2519 = vmax.xlane.f32.xlu0 %v2474
      %v2520 = vpop.xlane.xlu0 %2519
      %2521 = vmax.xlane.f32.xlu0 %v2479
      %v2522 = vpop.xlane.xlu0 %2521
      %2523 = vmax.xlane.f32.xlu0 %v2482
      %v2524 = vpop.xlane.xlu0 %2523
      %2525 = vmax.xlane.f32.xlu0 %v2487
      %v2526 = vpop.xlane.xlu0 %2525
      %2527 = vmax.xlane.f32.xlu0 %v2490
      %v2528 = vpop.xlane.xlu0 %2527
      %2529 = vmax.xlane.f32.xlu0 %v2495
      %v2530 = vpop.xlane.xlu0 %2529
      %2531 = vmax.xlane.f32.xlu0 %v2498
      %v2532 = vpop.xlane.xlu0 %2531
      %v2533 = vsub.f32 %v2439, %v2502
      %v2534 = vsub.f32 %v2442, %v2504
      %v2535 = vsub.f32 %v2447, %v2506
      %v2536 = vsub.f32 %v2450, %v2508
      %v2537 = vsub.f32 %v2455, %v2510
      %v2538 = vsub.f32 %v2458, %v2512
      %v2539 = vsub.f32 %v2463, %v2514
      %v2540 = vsub.f32 %v2466, %v2516
      %v2541 = vsub.f32 %v2471, %v2518
      %v2542 = vsub.f32 %v2474, %v2520
      %v2543 = vsub.f32 %v2479, %v2522
      %v2544 = vsub.f32 %v2482, %v2524
      %v2545 = vsub.f32 %v2487, %v2526
      %v2546 = vsub.f32 %v2490, %v2528
      %v2547 = vsub.f32 %v2495, %v2530
      %v2548 = vsub.f32 %v2498, %v2532
      %v2549 = vmul.f32 %v2533, 1.442695
      %v2550 = vpow.pop %v2549
      %v2551 = vmul.f32 %v2534, 1.442695
      %v2552 = vpow.pop %v2551
      %v2553 = vmul.f32 %v2535, 1.442695
      %v2554 = vpow.pop %v2553
      %v2555 = vmul.f32 %v2536, 1.442695
      %v2556 = vpow.pop %v2555
      %v2557 = vmul.f32 %v2537, 1.442695
      %v2558 = vpow.pop %v2557
      %v2559 = vmul.f32 %v2538, 1.442695
      %v2560 = vpow.pop %v2559
      %v2561 = vmul.f32 %v2539, 1.442695
      %v2562 = vpow.pop %v2561
      %v2563 = vmul.f32 %v2540, 1.442695
      %v2564 = vpow.pop %v2563
      %v2565 = vmul.f32 %v2541, 1.442695
      %v2566 = vpow.pop %v2565
      %v2567 = vmul.f32 %v2542, 1.442695
      %v2568 = vpow.pop %v2567
      %v2569 = vmul.f32 %v2543, 1.442695
      %v2570 = vpow.pop %v2569
      %v2571 = vmul.f32 %v2544, 1.442695
      %v2572 = vpow.pop %v2571
      %v2573 = vmul.f32 %v2545, 1.442695
      %v2574 = vpow.pop %v2573
      %v2575 = vmul.f32 %v2546, 1.442695
      %v2576 = vpow.pop %v2575
      %v2577 = vmul.f32 %v2547, 1.442695
      %v2578 = vpow.pop %v2577
      %v2579 = vmul.f32 %v2548, 1.442695
      %v2580 = vpow.pop %v2579
      %2581 = vadd.xlane.f32.xlu0 %v2550
      %v2582 = vpop.xlane.xlu0 %2581
      %2583 = vadd.xlane.f32.xlu0 %v2552
      %v2584 = vpop.xlane.xlu0 %2583
      %2585 = vadd.xlane.f32.xlu0 %v2554
      %v2586 = vpop.xlane.xlu0 %2585
      %2587 = vadd.xlane.f32.xlu0 %v2556
      %v2588 = vpop.xlane.xlu0 %2587
      %2589 = vadd.xlane.f32.xlu0 %v2558
      %v2590 = vpop.xlane.xlu0 %2589
      %2591 = vadd.xlane.f32.xlu0 %v2560
      %v2592 = vpop.xlane.xlu0 %2591
      %2593 = vadd.xlane.f32.xlu0 %v2562
      %v2594 = vpop.xlane.xlu0 %2593
      %2595 = vadd.xlane.f32.xlu0 %v2564
      %v2596 = vpop.xlane.xlu0 %2595
      %2597 = vadd.xlane.f32.xlu0 %v2566
      %v2598 = vpop.xlane.xlu0 %2597
      %2599 = vadd.xlane.f32.xlu0 %v2568
      %v2600 = vpop.xlane.xlu0 %2599
      %2601 = vadd.xlane.f32.xlu0 %v2570
      %v2602 = vpop.xlane.xlu0 %2601
      %2603 = vadd.xlane.f32.xlu0 %v2572
      %v2604 = vpop.xlane.xlu0 %2603
      %2605 = vadd.xlane.f32.xlu0 %v2574
      %v2606 = vpop.xlane.xlu0 %2605
      %2607 = vadd.xlane.f32.xlu0 %v2576
      %v2608 = vpop.xlane.xlu0 %2607
      %2609 = vadd.xlane.f32.xlu0 %v2578
      %v2610 = vpop.xlane.xlu0 %2609
      %2611 = vadd.xlane.f32.xlu0 %v2580
      %v2612 = vpop.xlane.xlu0 %2611
      %v2613 = vrcp.pop %v2582
      %v2614 = vmul.f32 %v2550, %v2613
      %v2615 = vrcp.pop %v2584
      %v2616 = vmul.f32 %v2552, %v2615
      %v2617 = vrcp.pop %v2586
      %v2618 = vmul.f32 %v2554, %v2617
      %v2619 = vrcp.pop %v2588
      %v2620 = vmul.f32 %v2556, %v2619
      %v2621 = vrcp.pop %v2590
      %v2622 = vmul.f32 %v2558, %v2621
      %v2623 = vrcp.pop %v2592
      %v2624 = vmul.f32 %v2560, %v2623
      %v2625 = vrcp.pop %v2594
      %v2626 = vmul.f32 %v2562, %v2625
      %v2627 = vrcp.pop %v2596
      %v2628 = vmul.f32 %v2564, %v2627
      %v2629 = vrcp.pop %v2598
      %v2630 = vmul.f32 %v2566, %v2629
      %v2631 = vrcp.pop %v2600
      %v2632 = vmul.f32 %v2568, %v2631
      %v2633 = vrcp.pop %v2602
      %v2634 = vmul.f32 %v2570, %v2633
      %v2635 = vrcp.pop %v2604
      %v2636 = vmul.f32 %v2572, %v2635
      %v2637 = vrcp.pop %v2606
      %v2638 = vmul.f32 %v2574, %v2637
      %v2639 = vrcp.pop %v2608
      %v2640 = vmul.f32 %v2576, %v2639
      %v2641 = vrcp.pop %v2610
      %v2642 = vmul.f32 %v2578, %v2641
      %v2643 = vrcp.pop %v2612
      %v2644 = vmul.f32 %v2580, %v2643
      %v2645 = vadd.f32 %v2614, %v2125
      %v2646 = vadd.f32 %v2616, %v2126
      %v2647 = vadd.f32 %v2618, %v2127
      %v2648 = vadd.f32 %v2620, %v2128
      %v2649 = vadd.f32 %v2622, %v2129
      %v2650 = vadd.f32 %v2624, %v2130
      %v2651 = vadd.f32 %v2626, %v2131
      %v2652 = vadd.f32 %v2628, %v2132
      %v2653 = vadd.f32 %v2630, %v2133
      %v2654 = vadd.f32 %v2632, %v2134
      %v2655 = vadd.f32 %v2634, %v2135
      %v2656 = vadd.f32 %v2636, %v2136
      %v2657 = vadd.f32 %v2638, %v2137
      %v2658 = vadd.f32 %v2640, %v2138
      %v2659 = vadd.f32 %v2642, %v2139
      %v2660 = vadd.f32 %v2644, %v2140
      %2661 = vst [vmem:[%s550] sm:$0xff] %v2645
      %2662 = vst [vmem:[%s550 + $0x8] sm:$0xff] %v2646
      %2663 = vst [vmem:[%s550 + $0x10] sm:$0xff] %v2647
      %2664 = vst [vmem:[%s550 + $0x18] sm:$0xff] %v2648
      %2665 = vst [vmem:[%s550 + $0x20] sm:$0xff] %v2649
      %2666 = vst [vmem:[%s550 + $0x28] sm:$0xff] %v2650
      %2667 = vst [vmem:[%s550 + $0x30] sm:$0xff] %v2651
      %2668 = vst [vmem:[%s550 + $0x38] sm:$0xff] %v2652
      %2669 = vst [vmem:[%s550 + $0x40] sm:$0xff] %v2653
      %2670 = vst [vmem:[%s550 + $0x48] sm:$0xff] %v2654
      %2671 = vst [vmem:[%s550 + $0x50] sm:$0xff] %v2655
      %2672 = vst [vmem:[%s550 + $0x58] sm:$0xff] %v2656
      %2673 = vst [vmem:[%s550 + $0x60] sm:$0xff] %v2657
      %2674 = vst [vmem:[%s550 + $0x68] sm:$0xff] %v2658
      %2675 = vst [vmem:[%s550 + $0x70] sm:$0xff] %v2659
      %2676 = vst [vmem:[%s550 + $0x78] sm:$0xff] %v2660
      %s2677 = smul.u32 16, %s28
      %p2678 = scmp.lt.s32.totalorder %s2677, 31
      %s2679 = scalar_select %p2678, %s2677, 31
      %s2680 = smul.addr %s2679, 8
      %s2681 = scalar_lea.vmem %s17, %s2680
      // Predicated region
      $region89: #{agent_forward.1} parent=87 // pred_check
        %p2682 = pneg %p408
      $region90: #{agent_forward.1} parent=87 // pred_check_branch
        %2684 = sbr.rel (%p2682) target = $region92
      $region91: #{agent_forward.1} parent=87 // pred_region
        %s2685 = smul.u32 16, %s28
      $region92: #{agent_forward.1} parent=87 // pred_fallthru
        _
    $region88: #{agent_forward.1} parent=5 // pred_fallthru
      _
    %p2686 = scmp.le.s32.totalorder 2, %s23
    // Predicated region
    $region93: #{agent_forward.1} parent=5 // pred_check
      %p2687 = pneg %p2686
    $region94: #{agent_forward.1} parent=5 // pred_check_branch
      %2689 = sbr.rel (%p2687) target = $region96
    $region95: #{agent_forward.1} parent=5 // pred_region
      %s2690 = ssub.s32 %s23, 2
      // Predicated region
      $region97: #{agent_forward.1} parent=95 // pred_check
        %p2691 = pneg %p414
      $region98: #{agent_forward.1} parent=95 // pred_check_branch
        %2693 = sbr.rel (%p2691) target = $region100
      $region99: #{agent_forward.1} parent=95 // pred_region
        %s2694 = smul.u32 16, %s29
        %p2695 = scmp.lt.s32.totalorder %s2694, 31
        %s2696 = scalar_select %p2695, %s2694, 31
        %s2697 = smul.addr %s2696, 8
        %s2698 = scalar_lea.vmem %s17, %s2697
      $region100: #{agent_forward.1} parent=95 // pred_fallthru
        _
    $region96: #{agent_forward.1} parent=5 // pred_fallthru
      _
  $region6: #{agent_forward.1} parent=0 // loop_footer
    %s27 = sadd.s32 1, %s23
  $region7: #{agent_forward.1} parent=0 // loop_footer_branch
    %22 = sbr.rel target = $region3
  $region8: #{agent_forward.1} parent=0 // loop_exit
    _

</llo_original>
